<compile_context>
chip_gen: v7x
topology: tpu7x:2x2x1
jax: 0.10.0
libtpu: 0.0.40
codegen_flags: <defaults>
</compile_context>

<pallas_src>
import functools

import jax
import jax.numpy as jnp
from jax.experimental import pallas as pl
from jax.experimental.pallas import tpu as pltpu

NUM_FREQS = 5                                  # get_embedder(5)
POS_DIM = 3
EMBED_DIM = POS_DIM * (1 + 2 * NUM_FREQS)      # 33 = include_input + sin/cos per freq
SIN_OFF = POS_DIM                              # 3  : start of the sin block in the kernel layout
COS_OFF = POS_DIM + POS_DIM * NUM_FREQS        # 18 : start of the cos block in the kernel layout


def _round_up(x, m):
    return (x + m - 1) // m * m


def _encoder_kernel(coords_ref, inten_ref, w_ref, b_ref, out_ref, emb_ref, *,
                    use_intensity):
    # coords_ref: (3, TN)    inten_ref: (1, TN)
    # w_ref:      (C, D)     b_ref:     (C, 1)
    # out_ref:    (C, TN)    emb_ref:   VMEM scratch (D, TN) f32
    x = coords_ref[...].astype(jnp.float32)                     # (3, TN), lane-dense

    # include_input rows
    emb_ref[0:POS_DIM, :] = x

    # Stage all 5 scaled copies of x into the sin region, then hit sin/cos
    # each ONCE on the stacked (15, TN) tile (batched EUP work).
    for k in range(NUM_FREQS):
        emb_ref[SIN_OFF + POS_DIM * k:SIN_OFF + POS_DIM * (k + 1), :] = x * float(2.0 ** k)
    xs = emb_ref[SIN_OFF:COS_OFF, :]                             # (15, TN)
    emb_ref[SIN_OFF:COS_OFF, :] = jnp.sin(xs)
    emb_ref[COS_OFF:EMBED_DIM, :] = jnp.cos(xs)

    if use_intensity:
        emb_ref[EMBED_DIM:EMBED_DIM + 1, :] = inten_ref[...].astype(jnp.float32)

    # Single fused matmul: (C, D) @ (D, TN) -> (C, TN), lane-dense output.
    acc = jnp.dot(w_ref[...].astype(jnp.float32), emb_ref[...],
                  preferred_element_type=jnp.float32,
                  precision=jax.lax.Precision.HIGHEST)
    acc = acc + b_ref[...].astype(jnp.float32)                   # (C,1) broadcast over lanes
    out_ref[...] = acc.astype(out_ref.dtype)


def encoder_forward(coords, intensity, weight, bias, *, use_intensity,
                    tile_n=2048, out_dtype=jnp.float32):
    """coords: [N,3] float32 world coords; intensity: [N,1] (ignored if not use_intensity);
    weight: [D_in, C] (= mix_fc.weight.T, rows in NeRF embedder order
    [x, sin f0, cos f0, sin f1, cos f1, ..., intensity]); bias: [C].
    Returns [N, C] in out_dtype."""
    n = coords.shape[0]
    d_in = EMBED_DIM + (1 if use_intensity else 0)
    assert weight.shape[0] == d_in, (weight.shape, d_in)
    c_dim = weight.shape[1]

    if intensity is None:
        intensity = jnp.zeros((n, 1), jnp.float32)

    # --- tile selection: large lane-dense tiles; shrink for small N; keep a few
    # grid steps for big N so both TCs / megacore stay busy.
    tile = min(max(int(tile_n), 128), _round_up(n, 128))
    tile = _round_up(tile, 128)
    while tile > 512 and _round_up(n, tile) // tile < 4:
        tile = _round_up(tile // 2, 128)
    n_pad = _round_up(n, tile)

    # Feature-major layout: put N on the lane axis (glue transposes are cheap,
    # single mem-bound passes).
    if n_pad != n:
        coords = jnp.pad(coords, ((0, n_pad - n), (0, 0)))
        intensity = jnp.pad(intensity, ((0, n_pad - n), (0, 0)))
    coords_t = coords.astype(jnp.float32).T                      # (3, n_pad)
    inten_t = intensity.astype(jnp.float32).T                    # (1, n_pad)

    # Permute weight rows from the PyTorch embedder order
    # [x, sin f0, cos f0, sin f1, cos f1, ..., intensity] to the kernel's
    # [x(3) | sin f0..f4 (15) | cos f0..f4 (15) | intensity(1)] layout.
    perm = list(range(POS_DIM))
    perm += [POS_DIM + 2 * POS_DIM * k + j
             for k in range(NUM_FREQS) for j in range(POS_DIM)]           # sin rows
    perm += [POS_DIM + 2 * POS_DIM * k + POS_DIM + j
             for k in range(NUM_FREQS) for j in range(POS_DIM)]           # cos rows
    if use_intensity:
        perm.append(EMBED_DIM)
    w = weight[jnp.asarray(perm), :]                             # (d_in, C)
    w_cd = w.astype(jnp.float32).T                               # (C, d_in)
    b_c1 = bias.astype(jnp.float32).reshape(c_dim, 1)            # (C, 1)

    kernel = functools.partial(_encoder_kernel, use_intensity=use_intensity)

    out_cn = pl.pallas_call(
        kernel,
        out_shape=jax.ShapeDtypeStruct((c_dim, n_pad), out_dtype),
        grid_spec=pltpu.PrefetchScalarGridSpec(
            num_scalar_prefetch=0,
            grid=(n_pad // tile,),
            in_specs=[
                pl.BlockSpec((POS_DIM, tile), lambda i: (0, i)),
                pl.BlockSpec((1, tile), lambda i: (0, i)),
                pl.BlockSpec((c_dim, d_in), lambda i: (0, 0)),
                pl.BlockSpec((c_dim, 1), lambda i: (0, 0)),
            ],
            out_specs=pl.BlockSpec((c_dim, tile), lambda i: (0, i)),
            scratch_shapes=[pltpu.VMEM((d_in, tile), jnp.float32)],
        ),
        compiler_params=pltpu.CompilerParams(
            dimension_semantics=("parallel",)),
    )(coords_t, inten_t, w_cd, b_c1)

    # Back to point-major [N, C]; drop padded rows.
    return out_cn.T[:n]


def reference_forward(coords, intensity, weight, bias, *, use_intensity):
    """Pure-JAX reference of the PyTorch forward (embed -> cat -> Linear)."""
    feats = [coords]
    for k in range(NUM_FREQS):
        xs = coords * (2.0 ** k)
        feats.append(jnp.sin(xs))
        feats.append(jnp.cos(xs))
    feat = jnp.concatenate(feats, axis=1)                        # [N, 33]
    if use_intensity:
        feat = jnp.concatenate([feat, intensity], axis=1)        # [N, 34]
    return jnp.dot(feat, weight, precision=jax.lax.Precision.HIGHEST) + bias


if __name__ == "__main__":
    key = jax.random.PRNGKey(0)
    k_ijk, k_inten, k_w, k_b = jax.random.split(key, 4)

    # Small synthetic "grid": N voxel coordinates (ijk), voxel_size + origin
    # stand in for grid.grid_to_world (an affine map applied in the glue).
    N = 200
    c_dim = 32
    use_input_intensity = True
    input_dim = EMBED_DIM + (1 if use_input_intensity else 0)    # 34

    ijk = jax.random.randint(k_ijk, (N, 3), minval=-32, maxval=32).astype(jnp.float32)
    voxel_size = jnp.asarray([0.1, 0.1, 0.1], dtype=jnp.float32)
    origin = jnp.asarray([0.05, 0.05, 0.05], dtype=jnp.float32)
    coords = ijk * voxel_size + origin                           # grid_to_world (glue)
    # TODO(synk): fvdb GridBatch / JaggedTensor bookkeeping has no Pallas analog;
    # the kernel operates on the flat [N, ...] point layout.

    intensity = jax.random.uniform(k_inten, (N, 1), dtype=jnp.float32)

    # mix_fc = nn.Linear(input_dim, c_dim); deterministic init (PyTorch-style uniform bound)
    bound = 1.0 / jnp.sqrt(jnp.asarray(input_dim, jnp.float32))
    # stored as [input_dim, c_dim] = mix_fc.weight.T
    mix_w = jax.random.uniform(k_w, (input_dim, c_dim), minval=-bound, maxval=bound,
                               dtype=jnp.float32)
    mix_b = jax.random.uniform(k_b, (c_dim,), minval=-bound, maxval=bound,
                               dtype=jnp.float32)

    out = encoder_forward(coords, intensity, mix_w, mix_b,
                          use_intensity=use_input_intensity)
    out = jax.block_until_ready(out)

    ref = reference_forward(coords, intensity, mix_w, mix_b,
                            use_intensity=use_input_intensity)
    assert out.shape == (N, c_dim)
    assert jnp.allclose(out, ref, atol=1e-3, rtol=1e-3), "mismatch vs reference"

    print("KERNEL_OK")
</pallas_src>

<mosaic_0001>
module attributes {stable_mosaic.version = 11 : i64} {
  func.func @_encoder_kernel(%arg0: i32, %arg1: memref<3x256xf32, #tpu.memory_space<vmem>>, %arg2: memref<1x256xf32, #tpu.memory_space<vmem>>, %arg3: memref<32x34xf32, #tpu.memory_space<vmem>>, %arg4: memref<32x1xf32, #tpu.memory_space<vmem>>, %arg5: memref<32x256xf32, #tpu.memory_space<vmem>>, %arg6: memref<34x256xf32, #tpu.memory_space<vmem>>) attributes {dimension_semantics = [#tpu.dimension_semantics<parallel>], iteration_bounds = array<i64: 1>, scalar_prefetch = 0 : i64, scratch_operands = 1 : i64, tpu.core_type = #tpu.core_type<tc>, window_params = [{transform_indices = @transform_0, window_bounds = array<i64: 3, 256>}, {transform_indices = @transform_1, window_bounds = array<i64: 1, 256>}, {pipeline_mode = #tpu.pipeline_mode<synchronous>, transform_indices = @transform_2, window_bounds = array<i64: 32, 34>}, {pipeline_mode = #tpu.pipeline_mode<synchronous>, transform_indices = @transform_3, window_bounds = array<i64: 32, 1>}, {transform_indices = @transform_4, window_bounds = array<i64: 32, 256>}]} {
    %c0 = arith.constant 0 : index
    %c0_0 = arith.constant 0 : index
    %0 = vector.load %arg1[%c0, %c0_0] : memref<3x256xf32, #tpu.memory_space<vmem>>, vector<3x256xf32>
    %c0_1 = arith.constant 0 : index
    %c0_2 = arith.constant 0 : index
    %1 = vector.load %arg6[%c0_1, %c0_2] : memref<34x256xf32, #tpu.memory_space<vmem>>, vector<3x256xf32>
    tpu.vector_store %arg6[%c0_1, %c0_2], %0 {strides = array<i32>} : memref<34x256xf32, #tpu.memory_space<vmem>>, vector<3x256xf32>,
    %cst = arith.constant 1.000000e+00 : f32
    %2 = vector.broadcast %cst : f32 to vector<3x256xf32>
    %3 = arith.mulf %0, %2 : vector<3x256xf32>
    %c3 = arith.constant 3 : index
    %c0_3 = arith.constant 0 : index
    %4 = vector.load %arg6[%c3, %c0_3] : memref<34x256xf32, #tpu.memory_space<vmem>>, vector<3x256xf32>
    tpu.vector_store %arg6[%c3, %c0_3], %3 {strides = array<i32>} : memref<34x256xf32, #tpu.memory_space<vmem>>, vector<3x256xf32>,
    %cst_4 = arith.constant 2.000000e+00 : f32
    %5 = vector.broadcast %cst_4 : f32 to vector<3x256xf32>
    %6 = arith.mulf %0, %5 : vector<3x256xf32>
    %c6 = arith.constant 6 : index
    %c0_5 = arith.constant 0 : index
    %7 = vector.load %arg6[%c6, %c0_5] : memref<34x256xf32, #tpu.memory_space<vmem>>, vector<3x256xf32>
    tpu.vector_store %arg6[%c6, %c0_5], %6 {strides = array<i32>} : memref<34x256xf32, #tpu.memory_space<vmem>>, vector<3x256xf32>,
    %cst_6 = arith.constant 4.000000e+00 : f32
    %8 = vector.broadcast %cst_6 : f32 to vector<3x256xf32>
    %9 = arith.mulf %0, %8 : vector<3x256xf32>
    %c9 = arith.constant 9 : index
    %c0_7 = arith.constant 0 : index
    %10 = vector.load %arg6[%c9, %c0_7] : memref<34x256xf32, #tpu.memory_space<vmem>>, vector<3x256xf32>
    tpu.vector_store %arg6[%c9, %c0_7], %9 {strides = array<i32>} : memref<34x256xf32, #tpu.memory_space<vmem>>, vector<3x256xf32>,
    %cst_8 = arith.constant 8.000000e+00 : f32
    %11 = vector.broadcast %cst_8 : f32 to vector<3x256xf32>
    %12 = arith.mulf %0, %11 : vector<3x256xf32>
    %c12 = arith.constant 12 : index
    %c0_9 = arith.constant 0 : index
    %13 = vector.load %arg6[%c12, %c0_9] : memref<34x256xf32, #tpu.memory_space<vmem>>, vector<3x256xf32>
    tpu.vector_store %arg6[%c12, %c0_9], %12 {strides = array<i32>} : memref<34x256xf32, #tpu.memory_space<vmem>>, vector<3x256xf32>,
    %cst_10 = arith.constant 1.600000e+01 : f32
    %14 = vector.broadcast %cst_10 : f32 to vector<3x256xf32>
    %15 = arith.mulf %0, %14 : vector<3x256xf32>
    %c15 = arith.constant 15 : index
    %c0_11 = arith.constant 0 : index
    %16 = vector.load %arg6[%c15, %c0_11] : memref<34x256xf32, #tpu.memory_space<vmem>>, vector<3x256xf32>
    tpu.vector_store %arg6[%c15, %c0_11], %15 {strides = array<i32>} : memref<34x256xf32, #tpu.memory_space<vmem>>, vector<3x256xf32>,
    %c3_12 = arith.constant 3 : index
    %c0_13 = arith.constant 0 : index
    %17 = vector.load %arg6[%c3_12, %c0_13] : memref<34x256xf32, #tpu.memory_space<vmem>>, vector<15x256xf32>
    %18 = math.sin %17 : vector<15x256xf32>
    %c3_14 = arith.constant 3 : index
    %c0_15 = arith.constant 0 : index
    %19 = vector.load %arg6[%c3_14, %c0_15] : memref<34x256xf32, #tpu.memory_space<vmem>>, vector<15x256xf32>
    tpu.vector_store %arg6[%c3_14, %c0_15], %18 {strides = array<i32>} : memref<34x256xf32, #tpu.memory_space<vmem>>, vector<15x256xf32>,
    %20 = math.cos %17 : vector<15x256xf32>
    %c18 = arith.constant 18 : index
    %c0_16 = arith.constant 0 : index
    %21 = vector.load %arg6[%c18, %c0_16] : memref<34x256xf32, #tpu.memory_space<vmem>>, vector<15x256xf32>
    tpu.vector_store %arg6[%c18, %c0_16], %20 {strides = array<i32>} : memref<34x256xf32, #tpu.memory_space<vmem>>, vector<15x256xf32>,
    %c0_17 = arith.constant 0 : index
    %c0_18 = arith.constant 0 : index
    %22 = vector.load %arg2[%c0_17, %c0_18] : memref<1x256xf32, #tpu.memory_space<vmem>>, vector<1x256xf32>
    %c33 = arith.constant 33 : index
    %c0_19 = arith.constant 0 : index
    %23 = vector.load %arg6[%c33, %c0_19] : memref<34x256xf32, #tpu.memory_space<vmem>>, vector<1x256xf32>
    tpu.vector_store %arg6[%c33, %c0_19], %22 {strides = array<i32>} : memref<34x256xf32, #tpu.memory_space<vmem>>, vector<1x256xf32>,
    %c0_20 = arith.constant 0 : index
    %c0_21 = arith.constant 0 : index
    %24 = vector.load %arg3[%c0_20, %c0_21] : memref<32x34xf32, #tpu.memory_space<vmem>>, vector<32x34xf32>
    %c0_22 = arith.constant 0 : index
    %c0_23 = arith.constant 0 : index
    %25 = vector.load %arg6[%c0_22, %c0_23] : memref<34x256xf32, #tpu.memory_space<vmem>>, vector<34x256xf32>
    %cst_24 = arith.constant dense<0.000000e+00> : vector<32x256xf32>
    %26 = tpu.matmul %24, %25, %cst_24 {dimension_numbers = #tpu.dot_dimension_numbers<[1], [0], [0], [1], [0, 0, 1, 1], [], []>, precision = #tpu.contract_precision<fp32>} : vector<32x34xf32>, vector<34x256xf32>, vector<32x256xf32> -> vector<32x256xf32>
    %c0_25 = arith.constant 0 : index
    %c0_26 = arith.constant 0 : index
    %27 = vector.load %arg4[%c0_25, %c0_26] : memref<32x1xf32, #tpu.memory_space<vmem>>, vector<32x1xf32>
    %28 = vector.broadcast %27 : vector<32x1xf32> to vector<32x256xf32>
    %29 = arith.addf %26, %28 : vector<32x256xf32>
    %c0_27 = arith.constant 0 : index
    %c0_28 = arith.constant 0 : index
    %30 = vector.load %arg5[%c0_27, %c0_28] : memref<32x256xf32, #tpu.memory_space<vmem>>, vector<32x256xf32>
    tpu.vector_store %arg5[%c0_27, %c0_28], %29 {strides = array<i32>} : memref<32x256xf32, #tpu.memory_space<vmem>>, vector<32x256xf32>,
    return
  }
  func.func @transform_0(%arg0: i32) -> (i32, i32) {
    %c0_i32 = arith.constant 0 : i32
    %c0_i32_0 = arith.constant 0 : i32
    return %c0_i32, %arg0 : i32, i32
  }
  func.func @transform_1(%arg0: i32) -> (i32, i32) {
    %c0_i32 = arith.constant 0 : i32
    %c0_i32_0 = arith.constant 0 : i32
    return %c0_i32, %arg0 : i32, i32
  }
  func.func @transform_2(%arg0: i32) -> (i32, i32) {
    %c0_i32 = arith.constant 0 : i32
    %c0_i32_0 = arith.constant 0 : i32
    %c0_i32_1 = arith.constant 0 : i32
    return %c0_i32, %c0_i32_0 : i32, i32
  }
  func.func @transform_3(%arg0: i32) -> (i32, i32) {
    %c0_i32 = arith.constant 0 : i32
    %c0_i32_0 = arith.constant 0 : i32
    %c0_i32_1 = arith.constant 0 : i32
    return %c0_i32, %c0_i32_0 : i32, i32
  }
  func.func @transform_4(%arg0: i32) -> (i32, i32) {
    %c0_i32 = arith.constant 0 : i32
    %c0_i32_0 = arith.constant 0 : i32
    return %c0_i32, %arg0 : i32, i32
  }
}

</mosaic_0001>

<llo_original>
// kernel: tpu_custom_call.1
$region0: #{tpu_custom_call.1}
  #allocation0 [shape = 'u32[]', space=smem, size = 0x4, offset = 0x4, fixed_abs, tag = 'smem constant byte address 0x4 - core index']
  #allocation1 [shape = 'u32[144,128]{1,0:T(1,128)}', space=vmem, size = 0x12000, scoped, tag = 'internal scratch']
  #allocation2 [shape = 'f32[34,256]{1,0:T(8,128)}', space=vmem, size = 0xa000, scoped, tag = 'scratch operand']
  %s0 = inlined_call_operand.vmem [shape: f32[3,256], index: 0, kind: input, shape index: {}]
  %s1 = inlined_call_operand.hbm [shape: f32[1,256], index: 1, kind: input, shape index: {}]
  %s2 = inlined_call_operand.vmem [shape: f32[32,34], index: 2, kind: input, shape index: {}]
  %s3 = inlined_call_operand.vmem [shape: f32[32,1], index: 3, kind: input, shape index: {}]
  %s4 = inlined_call_operand.hbm [shape: f32[32,256], index: 4, kind: output, shape index: {}]
  %s5 = sld [smem:[#allocation0]]
  $region30: #{tpu_custom_call.1} parent=0
    _
  %s7 = ssub.s32 1, %s5
  %s8 = scalar_select 0, %s7, %s5
  $region1: #{tpu_custom_call.1} parent=0
    #allocation3 [shape = 'u8[1024]{0}', space=vmem, size = 0x400, scoped, tag = 'input window, operand 1, single buffered']
    #allocation4 [shape = 's32[1]{0}', space=sflag, size = 0x4, scoped, tag = 'scoped memory for tpu_custom_call.1']
    #allocation5 [shape = 's32[1]{0}', space=sflag, size = 0x4, scoped, tag = 'scoped memory for tpu_custom_call.1']
    #allocation6 [shape = 'u8[32768]{0}', space=vmem, size = 0x8000, scoped, tag = 'output window, operand 0, single buffered']
    %9 = vsyncpa [#allocation4], 0
    %10 = vsyncpa [#allocation5], 0
    // Predicated region
    $region2: #{tpu_custom_call.1} parent=1 // pred_check
      _
    $region3: #{tpu_custom_call.1} parent=1 // pred_check_branch
      %12 = sbr.rel (0) target = $region5
    $region4: #{tpu_custom_call.1} parent=1 // pred_region
      _
    $region5: #{tpu_custom_call.1} parent=1 // pred_fallthru
      _
    // Predicated region
    $region6: #{tpu_custom_call.1} parent=1 // pred_check
      _
    $region7: #{tpu_custom_call.1} parent=1 // pred_check_branch
      %14 = sbr.rel (0) target = $region9
    $region8: #{tpu_custom_call.1} parent=1 // pred_region
      %s16 = ssub.s32 32, 32
      %17 = vsyncadd [#allocation4], %s16
      %s19 = sshll.u32 [#allocation3], 4
      %s20 = int_to_ptr.vmem [resolvable:$true] %s19
      %22 = dma.hbm_to_vmem [thread:$0]  %s1, 32, %s20, [#allocation4]
    $region9: #{tpu_custom_call.1} parent=1 // pred_fallthru
      _
    // Predicated region
    $region10: #{tpu_custom_call.1} parent=1 // pred_check
      _
    $region11: #{tpu_custom_call.1} parent=1 // pred_check_branch
      %24 = sbr.rel (0) target = $region13
    $region12: #{tpu_custom_call.1} parent=1 // pred_region
      _
    $region13: #{tpu_custom_call.1} parent=1 // pred_fallthru
      _
    // Predicated region
    $region14: #{tpu_custom_call.1} parent=1 // pred_check
      _
    $region15: #{tpu_custom_call.1} parent=1 // pred_check_branch
      %26 = sbr.rel (0) target = $region17
    $region16: #{tpu_custom_call.1} parent=1 // pred_region
      _
    $region17: #{tpu_custom_call.1} parent=1 // pred_fallthru
      _
    // Predicated region
    $region18: #{tpu_custom_call.1} parent=1 // pred_check
      _
    $region19: #{tpu_custom_call.1} parent=1 // pred_check_branch
      %28 = sbr.rel (0) target = $region21
    $region20: #{tpu_custom_call.1} parent=1 // pred_region
      %29 = dma.done [#allocation4], 32
    $region21: #{tpu_custom_call.1} parent=1 // pred_fallthru
      _
    %v30 = vld [vmem:[%s0] sm:$0x77]
    %v32 = vcombine.high %v30, %v30
    %34 = vst [vmem:[#allocation2] sm:$0x7] %v30
    %35 = vst [vmem:[#allocation2 + $0x8] sm:$0x7] %v32
    %v36 = vrot.slane %v30, 5
    %v37 = vrot.slane %v32, 5
    %40 = vst [vmem:[#allocation2] sm:$0x38] %v36
    %41 = vst [vmem:[#allocation2 + $0x8] sm:$0x38] %v37
    %v42 = vmul.f32 %v30, 2.0
    %v44 = vcombine.high %v42, %v42
    %v45 = vrot.slane %v42, 2
    %v46 = vrot.slane %v44, 2
    %49 = vst [vmem:[#allocation2] sm:$0xc0] %v45
    %50 = vst [vmem:[#allocation2 + $0x8] sm:$0xc0] %v46
    %51 = vst [vmem:[#allocation2 + $0x10] sm:$0x1] %v45
    %52 = vst [vmem:[#allocation2 + $0x18] sm:$0x1] %v46
    %v53 = vmul.f32 %v30, 4.0
    %v55 = vcombine.high %v53, %v53
    %v56 = vrot.slane %v53, 7
    %v57 = vrot.slane %v55, 7
    %60 = vst [vmem:[#allocation2 + $0x10] sm:$0xe] %v56
    %61 = vst [vmem:[#allocation2 + $0x18] sm:$0xe] %v57
    %v62 = vmul.f32 %v30, 8.0
    %v64 = vcombine.low %v62, %v62
    %66 = vst [vmem:[#allocation2 + $0x10] sm:$0x70] %v64
    %67 = vst [vmem:[#allocation2 + $0x18] sm:$0x70] %v62
    %v68 = vmul.f32 %v30, 16.0
    %v70 = vcombine.high %v68, %v68
    %v71 = vrot.slane %v68, 1
    %v72 = vrot.slane %v70, 1
    %75 = vst [vmem:[#allocation2 + $0x10] sm:$0x80] %v71
    %76 = vst [vmem:[#allocation2 + $0x18] sm:$0x80] %v72
    %77 = vst [vmem:[#allocation2 + $0x20] sm:$0x3] %v71
    %78 = vst [vmem:[#allocation2 + $0x28] sm:$0x3] %v72
    %v79 = vld [vmem:[#allocation2] sm:$0xf8]
    %v80 = vld [vmem:[#allocation2 + $0x8] sm:$0xf8]
    %v81 = vld [vmem:[#allocation2 + $0x10] sm:$0xff]
    %v82 = vld [vmem:[#allocation2 + $0x18] sm:$0xff]
    %v83 = vld [vmem:[#allocation2 + $0x20] sm:$0x3]
    %v84 = vld [vmem:[#allocation2 + $0x28] sm:$0x3]
    %v85 = vand.u32 2147483647, %v79
    %vm86 = vcmp.le.f32.partialorder %v85, 0.7853982
    %vm87 = vcmp.lt.s32.totalorder %v79, 0
    %v88 = vand.u32 %v79, 2139095040
    %v89 = vshrl.u32 %v88, 23
    %v90 = vsub.s32 %v89, 127
    %v91 = vand.u32 2147483647, %v79
    %v92 = vand.u32 %v91, 8388607
    %v93 = vor.u32 %v92, 8388608
    %v94 = vsub.s32 0, %v93
    %v95 = vadd.s32 %v90, 1
    %vm96 = vcmp.gt.s32.totalorder %v95, 0
    %v97 = vsel %vm96, %v95, 0
    %v98 = vshrl.u32 %v97, 5
    %v99 = vand.u32 %v97, 31
    %v100 = vsub.s32 32, %v99
    %v101 = vshrl.u32 683565275, %v100
    %v102 = vshll.u32 683565275, %v99
    %v103 = vshrl.u32 2475754826, %v100
    %v104 = vor.u32 %v102, %v103
    %v105 = vshll.u32 2475754826, %v99
    %v106 = vshrl.u32 2131351028, %v100
    %v107 = vor.u32 %v105, %v106
    %v108 = vshll.u32 2131351028, %v99
    %v109 = vshrl.u32 2102212464, %v100
    %v110 = vor.u32 %v108, %v109
    %v111 = vshll.u32 2102212464, %v99
    %v112 = vshrl.u32 920167782, %v100
    %v113 = vor.u32 %v111, %v112
    %v114 = vshll.u32 920167782, %v99
    %v115 = vshrl.u32 1326507024, %v100
    %v116 = vor.u32 %v114, %v115
    %vm117 = vcmp.lt.s32.totalorder %v98, 1
    %vm118 = vcmp.lt.s32.totalorder %v98, 2
    %vm119 = vcmp.lt.s32.totalorder %v98, 3
    %vm120 = vcmp.lt.s32.totalorder %v98, 4
    %v121 = vsel %vm117, %v101, %v104
    %v122 = vsel %vm120, %v110, 2102212464
    %v123 = vsel %vm119, %v107, %v122
    %v124 = vsel %vm118, %v121, %v123
    %v125 = vsel %vm117, %v104, %v107
    %v126 = vsel %vm120, %v113, 920167782
    %v127 = vsel %vm119, %v110, %v126
    %v128 = vsel %vm118, %v125, %v127
    %v129 = vsel %vm117, %v107, %v110
    %v130 = vsel %vm120, %v116, 1326507024
    %v131 = vsel %vm119, %v113, %v130
    %v132 = vsel %vm118, %v129, %v131
    %v133 = vshll.u32 %v93, 8
    %v134 = vmul.u32.u64.compose %v133, %v132
    %v135 = vextract.low.u32 %v134
    %v136 = vextract.high.u32 %v134
    %v137 = vmul.u32.u64.compose %v133, %v128
    %v138 = vextract.low.u32 %v137
    %v139 = vextract.high.u32 %v137
    %v140 = vmul.u32 %v133, %v124
    %v141 = vadd.s32 %v136, %v138
    %vm142 = vc.u32 %v136, %v138
    %v143 = vadd.s32 %v139, 1
    %v144 = vsel %vm142, %v143, %v139
    %v145 = vadd.s32 %v140, %v144
    %v146 = vadd.s32 %v145, 536870912
    %v147 = vshrl.u32 %v146, 30
    %v148 = vshll.u32 %v147, 30
    %v149 = vsub.s32 %v145, %v148
    %vm150 = vcmp.lt.s32.totalorder %v149, 0
    %v151 = vsub.s32 0, %v149
    %v152 = vsel %vm150, %v151, %v149
    %v153 = vclz %v152
    %v154 = vsub.s32 %v153, 2
    %vm155 = vcmp.gt.s32.totalorder 0, %v154
    %v156 = vsel %vm155, 0, %v154
    %v157 = vsub.s32 32, %v156
    %v158 = vshll.u32 %v149, %v156
    %v159 = vshrl.u32 %v141, %v157
    %v160 = vor.u32 %v158, %v159
    %v161 = vsub.s32 4294967266, %v156
    %v162 = vadd.s32 %v161, 127
    %v163 = vshll.u32 %v162, 23
    %v164 = vor.u32 4788187, %v163
    %v165 = vand.u32 2147483647, %v164
    %v167 = vcvt.s32.f32 %v160
    %v168 = vmul.f32 %v167, %v165
    %v169 = vxor.u32 %v168, 2147483648
    %v170 = vsel %vm87, %v169, %v168
    %v171 = vsub.s32 4, %v147
    %v172 = vsel %vm87, %v171, %v147
    %v173 = vsel %vm86, %v79, %v170
    %v174 = vsel %vm86, 0, %v172
    %v175 = vcosq.f32.pop %v173
    %v176 = vsinq.f32.pop %v173
    %vm177 = vweird.f32 %v79
    %v178 = vadd.s32 %v174, 3
    %v179 = vand.u32 %v178, 3
    %vm180 = vcmp.lt.s32.totalorder %v179, 2
    %vm181 = vcmp.eq.s32.totalorder %v179, 0
    %v182 = vxor.u32 %v176, 2147483648
    %v183 = vsel %vm181, %v175, %v182
    %vm184 = vcmp.eq.s32.totalorder %v179, 2
    %v185 = vxor.u32 %v175, 2147483648
    %v186 = vsel %vm184, %v185, %v176
    %v187 = vsel %vm180, %v183, %v186
    %v188 = vsel %vm177, nan, %v187
    %v189 = vand.u32 2147483647, %v80
    %vm190 = vcmp.le.f32.partialorder %v189, 0.7853982
    %vm191 = vcmp.lt.s32.totalorder %v80, 0
    %v192 = vand.u32 %v80, 2139095040
    %v193 = vshrl.u32 %v192, 23
    %v194 = vsub.s32 %v193, 127
    %v195 = vand.u32 2147483647, %v80
    %v196 = vand.u32 %v195, 8388607
    %v197 = vor.u32 %v196, 8388608
    %v198 = vsub.s32 0, %v197
    %v199 = vadd.s32 %v194, 1
    %vm200 = vcmp.gt.s32.totalorder %v199, 0
    %v201 = vsel %vm200, %v199, 0
    %v202 = vshrl.u32 %v201, 5
    %v203 = vand.u32 %v201, 31
    %v204 = vsub.s32 32, %v203
    %v205 = vshrl.u32 683565275, %v204
    %v206 = vshll.u32 683565275, %v203
    %v207 = vshrl.u32 2475754826, %v204
    %v208 = vor.u32 %v206, %v207
    %v209 = vshll.u32 2475754826, %v203
    %v210 = vshrl.u32 2131351028, %v204
    %v211 = vor.u32 %v209, %v210
    %v212 = vshll.u32 2131351028, %v203
    %v213 = vshrl.u32 2102212464, %v204
    %v214 = vor.u32 %v212, %v213
    %v215 = vshll.u32 2102212464, %v203
    %v216 = vshrl.u32 920167782, %v204
    %v217 = vor.u32 %v215, %v216
    %v218 = vshll.u32 920167782, %v203
    %v219 = vshrl.u32 1326507024, %v204
    %v220 = vor.u32 %v218, %v219
    %vm221 = vcmp.lt.s32.totalorder %v202, 1
    %vm222 = vcmp.lt.s32.totalorder %v202, 2
    %vm223 = vcmp.lt.s32.totalorder %v202, 3
    %vm224 = vcmp.lt.s32.totalorder %v202, 4
    %v225 = vsel %vm221, %v205, %v208
    %v226 = vsel %vm224, %v214, 2102212464
    %v227 = vsel %vm223, %v211, %v226
    %v228 = vsel %vm222, %v225, %v227
    %v229 = vsel %vm221, %v208, %v211
    %v230 = vsel %vm224, %v217, 920167782
    %v231 = vsel %vm223, %v214, %v230
    %v232 = vsel %vm222, %v229, %v231
    %v233 = vsel %vm221, %v211, %v214
    %v234 = vsel %vm224, %v220, 1326507024
    %v235 = vsel %vm223, %v217, %v234
    %v236 = vsel %vm222, %v233, %v235
    %v237 = vshll.u32 %v197, 8
    %v238 = vmul.u32.u64.compose %v237, %v236
    %v239 = vextract.low.u32 %v238
    %v240 = vextract.high.u32 %v238
    %v241 = vmul.u32.u64.compose %v237, %v232
    %v242 = vextract.low.u32 %v241
    %v243 = vextract.high.u32 %v241
    %v244 = vmul.u32 %v237, %v228
    %v245 = vadd.s32 %v240, %v242
    %vm246 = vc.u32 %v240, %v242
    %v247 = vadd.s32 %v243, 1
    %v248 = vsel %vm246, %v247, %v243
    %v249 = vadd.s32 %v244, %v248
    %v250 = vadd.s32 %v249, 536870912
    %v251 = vshrl.u32 %v250, 30
    %v252 = vshll.u32 %v251, 30
    %v253 = vsub.s32 %v249, %v252
    %vm254 = vcmp.lt.s32.totalorder %v253, 0
    %v255 = vsub.s32 0, %v253
    %v256 = vsel %vm254, %v255, %v253
    %v257 = vclz %v256
    %v258 = vsub.s32 %v257, 2
    %vm259 = vcmp.gt.s32.totalorder 0, %v258
    %v260 = vsel %vm259, 0, %v258
    %v261 = vsub.s32 32, %v260
    %v262 = vshll.u32 %v253, %v260
    %v263 = vshrl.u32 %v245, %v261
    %v264 = vor.u32 %v262, %v263
    %v265 = vsub.s32 4294967266, %v260
    %v266 = vadd.s32 %v265, 127
    %v267 = vshll.u32 %v266, 23
    %v268 = vor.u32 4788187, %v267
    %v269 = vand.u32 2147483647, %v268
    %v271 = vcvt.s32.f32 %v264
    %v272 = vmul.f32 %v271, %v269
    %v273 = vxor.u32 %v272, 2147483648
    %v274 = vsel %vm191, %v273, %v272
    %v275 = vsub.s32 4, %v251
    %v276 = vsel %vm191, %v275, %v251
    %v277 = vsel %vm190, %v80, %v274
    %v278 = vsel %vm190, 0, %v276
    %v279 = vcosq.f32.pop %v277
    %v280 = vsinq.f32.pop %v277
    %vm281 = vweird.f32 %v80
    %v282 = vadd.s32 %v278, 3
    %v283 = vand.u32 %v282, 3
    %vm284 = vcmp.lt.s32.totalorder %v283, 2
    %vm285 = vcmp.eq.s32.totalorder %v283, 0
    %v286 = vxor.u32 %v280, 2147483648
    %v287 = vsel %vm285, %v279, %v286
    %vm288 = vcmp.eq.s32.totalorder %v283, 2
    %v289 = vxor.u32 %v279, 2147483648
    %v290 = vsel %vm288, %v289, %v280
    %v291 = vsel %vm284, %v287, %v290
    %v292 = vsel %vm281, nan, %v291
    %v293 = vand.u32 2147483647, %v81
    %vm294 = vcmp.le.f32.partialorder %v293, 0.7853982
    %vm295 = vcmp.lt.s32.totalorder %v81, 0
    %v296 = vand.u32 %v81, 2139095040
    %v297 = vshrl.u32 %v296, 23
    %v298 = vsub.s32 %v297, 127
    %v299 = vand.u32 2147483647, %v81
    %v300 = vand.u32 %v299, 8388607
    %v301 = vor.u32 %v300, 8388608
    %v302 = vsub.s32 0, %v301
    %v303 = vadd.s32 %v298, 1
    %vm304 = vcmp.gt.s32.totalorder %v303, 0
    %v305 = vsel %vm304, %v303, 0
    %v306 = vshrl.u32 %v305, 5
    %v307 = vand.u32 %v305, 31
    %v308 = vsub.s32 32, %v307
    %v309 = vshrl.u32 683565275, %v308
    %v310 = vshll.u32 683565275, %v307
    %v311 = vshrl.u32 2475754826, %v308
    %v312 = vor.u32 %v310, %v311
    %v313 = vshll.u32 2475754826, %v307
    %v314 = vshrl.u32 2131351028, %v308
    %v315 = vor.u32 %v313, %v314
    %v316 = vshll.u32 2131351028, %v307
    %v317 = vshrl.u32 2102212464, %v308
    %v318 = vor.u32 %v316, %v317
    %v319 = vshll.u32 2102212464, %v307
    %v320 = vshrl.u32 920167782, %v308
    %v321 = vor.u32 %v319, %v320
    %v322 = vshll.u32 920167782, %v307
    %v323 = vshrl.u32 1326507024, %v308
    %v324 = vor.u32 %v322, %v323
    %vm325 = vcmp.lt.s32.totalorder %v306, 1
    %vm326 = vcmp.lt.s32.totalorder %v306, 2
    %vm327 = vcmp.lt.s32.totalorder %v306, 3
    %vm328 = vcmp.lt.s32.totalorder %v306, 4
    %v329 = vsel %vm325, %v309, %v312
    %v330 = vsel %vm328, %v318, 2102212464
    %v331 = vsel %vm327, %v315, %v330
    %v332 = vsel %vm326, %v329, %v331
    %v333 = vsel %vm325, %v312, %v315
    %v334 = vsel %vm328, %v321, 920167782
    %v335 = vsel %vm327, %v318, %v334
    %v336 = vsel %vm326, %v333, %v335
    %v337 = vsel %vm325, %v315, %v318
    %v338 = vsel %vm328, %v324, 1326507024
    %v339 = vsel %vm327, %v321, %v338
    %v340 = vsel %vm326, %v337, %v339
    %v341 = vshll.u32 %v301, 8
    %v342 = vmul.u32.u64.compose %v341, %v340
    %v343 = vextract.low.u32 %v342
    %v344 = vextract.high.u32 %v342
    %v345 = vmul.u32.u64.compose %v341, %v336
    %v346 = vextract.low.u32 %v345
    %v347 = vextract.high.u32 %v345
    %v348 = vmul.u32 %v341, %v332
    %v349 = vadd.s32 %v344, %v346
    %vm350 = vc.u32 %v344, %v346
    %v351 = vadd.s32 %v347, 1
    %v352 = vsel %vm350, %v351, %v347
    %v353 = vadd.s32 %v348, %v352
    %v354 = vadd.s32 %v353, 536870912
    %v355 = vshrl.u32 %v354, 30
    %v356 = vshll.u32 %v355, 30
    %v357 = vsub.s32 %v353, %v356
    %vm358 = vcmp.lt.s32.totalorder %v357, 0
    %v359 = vsub.s32 0, %v357
    %v360 = vsel %vm358, %v359, %v357
    %v361 = vclz %v360
    %v362 = vsub.s32 %v361, 2
    %vm363 = vcmp.gt.s32.totalorder 0, %v362
    %v364 = vsel %vm363, 0, %v362
    %v365 = vsub.s32 32, %v364
    %v366 = vshll.u32 %v357, %v364
    %v367 = vshrl.u32 %v349, %v365
    %v368 = vor.u32 %v366, %v367
    %v369 = vsub.s32 4294967266, %v364
    %v370 = vadd.s32 %v369, 127
    %v371 = vshll.u32 %v370, 23
    %v372 = vor.u32 4788187, %v371
    %v373 = vand.u32 2147483647, %v372
    %v375 = vcvt.s32.f32 %v368
    %v376 = vmul.f32 %v375, %v373
    %v377 = vxor.u32 %v376, 2147483648
    %v378 = vsel %vm295, %v377, %v376
    %v379 = vsub.s32 4, %v355
    %v380 = vsel %vm295, %v379, %v355
    %v381 = vsel %vm294, %v81, %v378
    %v382 = vsel %vm294, 0, %v380
    %v383 = vcosq.f32.pop %v381
    %v384 = vsinq.f32.pop %v381
    %vm385 = vweird.f32 %v81
    %v386 = vadd.s32 %v382, 3
    %v387 = vand.u32 %v386, 3
    %vm388 = vcmp.lt.s32.totalorder %v387, 2
    %vm389 = vcmp.eq.s32.totalorder %v387, 0
    %v390 = vxor.u32 %v384, 2147483648
    %v391 = vsel %vm389, %v383, %v390
    %vm392 = vcmp.eq.s32.totalorder %v387, 2
    %v393 = vxor.u32 %v383, 2147483648
    %v394 = vsel %vm392, %v393, %v384
    %v395 = vsel %vm388, %v391, %v394
    %v396 = vsel %vm385, nan, %v395
    %v397 = vand.u32 2147483647, %v82
    %vm398 = vcmp.le.f32.partialorder %v397, 0.7853982
    %vm399 = vcmp.lt.s32.totalorder %v82, 0
    %v400 = vand.u32 %v82, 2139095040
    %v401 = vshrl.u32 %v400, 23
    %v402 = vsub.s32 %v401, 127
    %v403 = vand.u32 2147483647, %v82
    %v404 = vand.u32 %v403, 8388607
    %v405 = vor.u32 %v404, 8388608
    %v406 = vsub.s32 0, %v405
    %v407 = vadd.s32 %v402, 1
    %vm408 = vcmp.gt.s32.totalorder %v407, 0
    %v409 = vsel %vm408, %v407, 0
    %v410 = vshrl.u32 %v409, 5
    %v411 = vand.u32 %v409, 31
    %v412 = vsub.s32 32, %v411
    %v413 = vshrl.u32 683565275, %v412
    %v414 = vshll.u32 683565275, %v411
    %v415 = vshrl.u32 2475754826, %v412
    %v416 = vor.u32 %v414, %v415
    %v417 = vshll.u32 2475754826, %v411
    %v418 = vshrl.u32 2131351028, %v412
    %v419 = vor.u32 %v417, %v418
    %v420 = vshll.u32 2131351028, %v411
    %v421 = vshrl.u32 2102212464, %v412
    %v422 = vor.u32 %v420, %v421
    %v423 = vshll.u32 2102212464, %v411
    %v424 = vshrl.u32 920167782, %v412
    %v425 = vor.u32 %v423, %v424
    %v426 = vshll.u32 920167782, %v411
    %v427 = vshrl.u32 1326507024, %v412
    %v428 = vor.u32 %v426, %v427
    %vm429 = vcmp.lt.s32.totalorder %v410, 1
    %vm430 = vcmp.lt.s32.totalorder %v410, 2
    %vm431 = vcmp.lt.s32.totalorder %v410, 3
    %vm432 = vcmp.lt.s32.totalorder %v410, 4
    %v433 = vsel %vm429, %v413, %v416
    %v434 = vsel %vm432, %v422, 2102212464
    %v435 = vsel %vm431, %v419, %v434
    %v436 = vsel %vm430, %v433, %v435
    %v437 = vsel %vm429, %v416, %v419
    %v438 = vsel %vm432, %v425, 920167782
    %v439 = vsel %vm431, %v422, %v438
    %v440 = vsel %vm430, %v437, %v439
    %v441 = vsel %vm429, %v419, %v422
    %v442 = vsel %vm432, %v428, 1326507024
    %v443 = vsel %vm431, %v425, %v442
    %v444 = vsel %vm430, %v441, %v443
    %v445 = vshll.u32 %v405, 8
    %v446 = vmul.u32.u64.compose %v445, %v444
    %v447 = vextract.low.u32 %v446
    %v448 = vextract.high.u32 %v446
    %v449 = vmul.u32.u64.compose %v445, %v440
    %v450 = vextract.low.u32 %v449
    %v451 = vextract.high.u32 %v449
    %v452 = vmul.u32 %v445, %v436
    %v453 = vadd.s32 %v448, %v450
    %vm454 = vc.u32 %v448, %v450
    %v455 = vadd.s32 %v451, 1
    %v456 = vsel %vm454, %v455, %v451
    %v457 = vadd.s32 %v452, %v456
    %v458 = vadd.s32 %v457, 536870912
    %v459 = vshrl.u32 %v458, 30
    %v460 = vshll.u32 %v459, 30
    %v461 = vsub.s32 %v457, %v460
    %vm462 = vcmp.lt.s32.totalorder %v461, 0
    %v463 = vsub.s32 0, %v461
    %v464 = vsel %vm462, %v463, %v461
    %v465 = vclz %v464
    %v466 = vsub.s32 %v465, 2
    %vm467 = vcmp.gt.s32.totalorder 0, %v466
    %v468 = vsel %vm467, 0, %v466
    %v469 = vsub.s32 32, %v468
    %v470 = vshll.u32 %v461, %v468
    %v471 = vshrl.u32 %v453, %v469
    %v472 = vor.u32 %v470, %v471
    %v473 = vsub.s32 4294967266, %v468
    %v474 = vadd.s32 %v473, 127
    %v475 = vshll.u32 %v474, 23
    %v476 = vor.u32 4788187, %v475
    %v477 = vand.u32 2147483647, %v476
    %v479 = vcvt.s32.f32 %v472
    %v480 = vmul.f32 %v479, %v477
    %v481 = vxor.u32 %v480, 2147483648
    %v482 = vsel %vm399, %v481, %v480
    %v483 = vsub.s32 4, %v459
    %v484 = vsel %vm399, %v483, %v459
    %v485 = vsel %vm398, %v82, %v482
    %v486 = vsel %vm398, 0, %v484
    %v487 = vcosq.f32.pop %v485
    %v488 = vsinq.f32.pop %v485
    %vm489 = vweird.f32 %v82
    %v490 = vadd.s32 %v486, 3
    %v491 = vand.u32 %v490, 3
    %vm492 = vcmp.lt.s32.totalorder %v491, 2
    %vm493 = vcmp.eq.s32.totalorder %v491, 0
    %v494 = vxor.u32 %v488, 2147483648
    %v495 = vsel %vm493, %v487, %v494
    %vm496 = vcmp.eq.s32.totalorder %v491, 2
    %v497 = vxor.u32 %v487, 2147483648
    %v498 = vsel %vm496, %v497, %v488
    %v499 = vsel %vm492, %v495, %v498
    %v500 = vsel %vm489, nan, %v499
    %v501 = vand.u32 2147483647, %v83
    %vm502 = vcmp.le.f32.partialorder %v501, 0.7853982
    %vm503 = vcmp.lt.s32.totalorder %v83, 0
    %v504 = vand.u32 %v83, 2139095040
    %v505 = vshrl.u32 %v504, 23
    %v506 = vsub.s32 %v505, 127
    %v507 = vand.u32 2147483647, %v83
    %v508 = vand.u32 %v507, 8388607
    %v509 = vor.u32 %v508, 8388608
    %v510 = vsub.s32 0, %v509
    %v511 = vadd.s32 %v506, 1
    %vm512 = vcmp.gt.s32.totalorder %v511, 0
    %v513 = vsel %vm512, %v511, 0
    %v514 = vshrl.u32 %v513, 5
    %v515 = vand.u32 %v513, 31
    %v516 = vsub.s32 32, %v515
    %v517 = vshrl.u32 683565275, %v516
    %v518 = vshll.u32 683565275, %v515
    %v519 = vshrl.u32 2475754826, %v516
    %v520 = vor.u32 %v518, %v519
    %v521 = vshll.u32 2475754826, %v515
    %v522 = vshrl.u32 2131351028, %v516
    %v523 = vor.u32 %v521, %v522
    %v524 = vshll.u32 2131351028, %v515
    %v525 = vshrl.u32 2102212464, %v516
    %v526 = vor.u32 %v524, %v525
    %v527 = vshll.u32 2102212464, %v515
    %v528 = vshrl.u32 920167782, %v516
    %v529 = vor.u32 %v527, %v528
    %v530 = vshll.u32 920167782, %v515
    %v531 = vshrl.u32 1326507024, %v516
    %v532 = vor.u32 %v530, %v531
    %vm533 = vcmp.lt.s32.totalorder %v514, 1
    %vm534 = vcmp.lt.s32.totalorder %v514, 2
    %vm535 = vcmp.lt.s32.totalorder %v514, 3
    %vm536 = vcmp.lt.s32.totalorder %v514, 4
    %v537 = vsel %vm533, %v517, %v520
    %v538 = vsel %vm536, %v526, 2102212464
    %v539 = vsel %vm535, %v523, %v538
    %v540 = vsel %vm534, %v537, %v539
    %v541 = vsel %vm533, %v520, %v523
    %v542 = vsel %vm536, %v529, 920167782
    %v543 = vsel %vm535, %v526, %v542
    %v544 = vsel %vm534, %v541, %v543
    %v545 = vsel %vm533, %v523, %v526
    %v546 = vsel %vm536, %v532, 1326507024
    %v547 = vsel %vm535, %v529, %v546
    %v548 = vsel %vm534, %v545, %v547
    %v549 = vshll.u32 %v509, 8
    %v550 = vmul.u32.u64.compose %v549, %v548
    %v551 = vextract.low.u32 %v550
    %v552 = vextract.high.u32 %v550
    %v553 = vmul.u32.u64.compose %v549, %v544
    %v554 = vextract.low.u32 %v553
    %v555 = vextract.high.u32 %v553
    %v556 = vmul.u32 %v549, %v540
    %v557 = vadd.s32 %v552, %v554
    %vm558 = vc.u32 %v552, %v554
    %v559 = vadd.s32 %v555, 1
    %v560 = vsel %vm558, %v559, %v555
    %v561 = vadd.s32 %v556, %v560
    %v562 = vadd.s32 %v561, 536870912
    %v563 = vshrl.u32 %v562, 30
    %v564 = vshll.u32 %v563, 30
    %v565 = vsub.s32 %v561, %v564
    %vm566 = vcmp.lt.s32.totalorder %v565, 0
    %v567 = vsub.s32 0, %v565
    %v568 = vsel %vm566, %v567, %v565
    %v569 = vclz %v568
    %v570 = vsub.s32 %v569, 2
    %vm571 = vcmp.gt.s32.totalorder 0, %v570
    %v572 = vsel %vm571, 0, %v570
    %v573 = vsub.s32 32, %v572
    %v574 = vshll.u32 %v565, %v572
    %v575 = vshrl.u32 %v557, %v573
    %v576 = vor.u32 %v574, %v575
    %v577 = vsub.s32 4294967266, %v572
    %v578 = vadd.s32 %v577, 127
    %v579 = vshll.u32 %v578, 23
    %v580 = vor.u32 4788187, %v579
    %v581 = vand.u32 2147483647, %v580
    %v583 = vcvt.s32.f32 %v576
    %v584 = vmul.f32 %v583, %v581
    %v585 = vxor.u32 %v584, 2147483648
    %v586 = vsel %vm503, %v585, %v584
    %v587 = vsub.s32 4, %v563
    %v588 = vsel %vm503, %v587, %v563
    %v589 = vsel %vm502, %v83, %v586
    %v590 = vsel %vm502, 0, %v588
    %v591 = vcosq.f32.pop %v589
    %v592 = vsinq.f32.pop %v589
    %vm593 = vweird.f32 %v83
    %v594 = vadd.s32 %v590, 3
    %v595 = vand.u32 %v594, 3
    %vm596 = vcmp.lt.s32.totalorder %v595, 2
    %vm597 = vcmp.eq.s32.totalorder %v595, 0
    %v598 = vxor.u32 %v592, 2147483648
    %v599 = vsel %vm597, %v591, %v598
    %vm600 = vcmp.eq.s32.totalorder %v595, 2
    %v601 = vxor.u32 %v591, 2147483648
    %v602 = vsel %vm600, %v601, %v592
    %v603 = vsel %vm596, %v599, %v602
    %v604 = vsel %vm593, nan, %v603
    %v605 = vand.u32 2147483647, %v84
    %vm606 = vcmp.le.f32.partialorder %v605, 0.7853982
    %vm607 = vcmp.lt.s32.totalorder %v84, 0
    %v608 = vand.u32 %v84, 2139095040
    %v609 = vshrl.u32 %v608, 23
    %v610 = vsub.s32 %v609, 127
    %v611 = vand.u32 2147483647, %v84
    %v612 = vand.u32 %v611, 8388607
    %v613 = vor.u32 %v612, 8388608
    %v614 = vsub.s32 0, %v613
    %v615 = vadd.s32 %v610, 1
    %vm616 = vcmp.gt.s32.totalorder %v615, 0
    %v617 = vsel %vm616, %v615, 0
    %v618 = vshrl.u32 %v617, 5
    %v619 = vand.u32 %v617, 31
    %v620 = vsub.s32 32, %v619
    %v621 = vshrl.u32 683565275, %v620
    %v622 = vshll.u32 683565275, %v619
    %v623 = vshrl.u32 2475754826, %v620
    %v624 = vor.u32 %v622, %v623
    %v625 = vshll.u32 2475754826, %v619
    %v626 = vshrl.u32 2131351028, %v620
    %v627 = vor.u32 %v625, %v626
    %v628 = vshll.u32 2131351028, %v619
    %v629 = vshrl.u32 2102212464, %v620
    %v630 = vor.u32 %v628, %v629
    %v631 = vshll.u32 2102212464, %v619
    %v632 = vshrl.u32 920167782, %v620
    %v633 = vor.u32 %v631, %v632
    %v634 = vshll.u32 920167782, %v619
    %v635 = vshrl.u32 1326507024, %v620
    %v636 = vor.u32 %v634, %v635
    %vm637 = vcmp.lt.s32.totalorder %v618, 1
    %vm638 = vcmp.lt.s32.totalorder %v618, 2
    %vm639 = vcmp.lt.s32.totalorder %v618, 3
    %vm640 = vcmp.lt.s32.totalorder %v618, 4
    %v641 = vsel %vm637, %v621, %v624
    %v642 = vsel %vm640, %v630, 2102212464
    %v643 = vsel %vm639, %v627, %v642
    %v644 = vsel %vm638, %v641, %v643
    %v645 = vsel %vm637, %v624, %v627
    %v646 = vsel %vm640, %v633, 920167782
    %v647 = vsel %vm639, %v630, %v646
    %v648 = vsel %vm638, %v645, %v647
    %v649 = vsel %vm637, %v627, %v630
    %v650 = vsel %vm640, %v636, 1326507024
    %v651 = vsel %vm639, %v633, %v650
    %v652 = vsel %vm638, %v649, %v651
    %v653 = vshll.u32 %v613, 8
    %v654 = vmul.u32.u64.compose %v653, %v652
    %v655 = vextract.low.u32 %v654
    %v656 = vextract.high.u32 %v654
    %v657 = vmul.u32.u64.compose %v653, %v648
    %v658 = vextract.low.u32 %v657
    %v659 = vextract.high.u32 %v657
    %v660 = vmul.u32 %v653, %v644
    %v661 = vadd.s32 %v656, %v658
    %vm662 = vc.u32 %v656, %v658
    %v663 = vadd.s32 %v659, 1
    %v664 = vsel %vm662, %v663, %v659
    %v665 = vadd.s32 %v660, %v664
    %v666 = vadd.s32 %v665, 536870912
    %v667 = vshrl.u32 %v666, 30
    %v668 = vshll.u32 %v667, 30
    %v669 = vsub.s32 %v665, %v668
    %vm670 = vcmp.lt.s32.totalorder %v669, 0
    %v671 = vsub.s32 0, %v669
    %v672 = vsel %vm670, %v671, %v669
    %v673 = vclz %v672
    %v674 = vsub.s32 %v673, 2
    %vm675 = vcmp.gt.s32.totalorder 0, %v674
    %v676 = vsel %vm675, 0, %v674
    %v677 = vsub.s32 32, %v676
    %v678 = vshll.u32 %v669, %v676
    %v679 = vshrl.u32 %v661, %v677
    %v680 = vor.u32 %v678, %v679
    %v681 = vsub.s32 4294967266, %v676
    %v682 = vadd.s32 %v681, 127
    %v683 = vshll.u32 %v682, 23
    %v684 = vor.u32 4788187, %v683
    %v685 = vand.u32 2147483647, %v684
    %v687 = vcvt.s32.f32 %v680
    %v688 = vmul.f32 %v687, %v685
    %v689 = vxor.u32 %v688, 2147483648
    %v690 = vsel %vm607, %v689, %v688
    %v691 = vsub.s32 4, %v667
    %v692 = vsel %vm607, %v691, %v667
    %v693 = vsel %vm606, %v84, %v690
    %v694 = vsel %vm606, 0, %v692
    %v695 = vcosq.f32.pop %v693
    %v696 = vsinq.f32.pop %v693
    %vm697 = vweird.f32 %v84
    %v698 = vadd.s32 %v694, 3
    %v699 = vand.u32 %v698, 3
    %vm700 = vcmp.lt.s32.totalorder %v699, 2
    %vm701 = vcmp.eq.s32.totalorder %v699, 0
    %v702 = vxor.u32 %v696, 2147483648
    %v703 = vsel %vm701, %v695, %v702
    %vm704 = vcmp.eq.s32.totalorder %v699, 2
    %v705 = vxor.u32 %v695, 2147483648
    %v706 = vsel %vm704, %v705, %v696
    %v707 = vsel %vm700, %v703, %v706
    %v708 = vsel %vm697, nan, %v707
    %709 = vst [vmem:[#allocation2] sm:$0xf8] %v188
    %710 = vst [vmem:[#allocation2 + $0x8] sm:$0xf8] %v292
    %711 = vst [vmem:[#allocation2 + $0x10] sm:$0xff] %v396
    %712 = vst [vmem:[#allocation2 + $0x18] sm:$0xff] %v500
    %713 = vst [vmem:[#allocation2 + $0x20] sm:$0x3] %v604
    %714 = vst [vmem:[#allocation2 + $0x28] sm:$0x3] %v708
    %v715 = vand.u32 2147483647, %v79
    %vm716 = vcmp.le.f32.partialorder %v715, 0.7853982
    %vm717 = vcmp.lt.s32.totalorder %v79, 0
    %v718 = vand.u32 %v79, 2139095040
    %v719 = vshrl.u32 %v718, 23
    %v720 = vsub.s32 %v719, 127
    %v721 = vand.u32 2147483647, %v79
    %v722 = vand.u32 %v721, 8388607
    %v723 = vor.u32 %v722, 8388608
    %v724 = vsub.s32 0, %v723
    %v725 = vadd.s32 %v720, 1
    %vm726 = vcmp.gt.s32.totalorder %v725, 0
    %v727 = vsel %vm726, %v725, 0
    %v728 = vshrl.u32 %v727, 5
    %v729 = vand.u32 %v727, 31
    %v730 = vsub.s32 32, %v729
    %v731 = vshrl.u32 683565275, %v730
    %v732 = vshll.u32 683565275, %v729
    %v733 = vshrl.u32 2475754826, %v730
    %v734 = vor.u32 %v732, %v733
    %v735 = vshll.u32 2475754826, %v729
    %v736 = vshrl.u32 2131351028, %v730
    %v737 = vor.u32 %v735, %v736
    %v738 = vshll.u32 2131351028, %v729
    %v739 = vshrl.u32 2102212464, %v730
    %v740 = vor.u32 %v738, %v739
    %v741 = vshll.u32 2102212464, %v729
    %v742 = vshrl.u32 920167782, %v730
    %v743 = vor.u32 %v741, %v742
    %v744 = vshll.u32 920167782, %v729
    %v745 = vshrl.u32 1326507024, %v730
    %v746 = vor.u32 %v744, %v745
    %vm747 = vcmp.lt.s32.totalorder %v728, 1
    %vm748 = vcmp.lt.s32.totalorder %v728, 2
    %vm749 = vcmp.lt.s32.totalorder %v728, 3
    %vm750 = vcmp.lt.s32.totalorder %v728, 4
    %v751 = vsel %vm747, %v731, %v734
    %v752 = vsel %vm750, %v740, 2102212464
    %v753 = vsel %vm749, %v737, %v752
    %v754 = vsel %vm748, %v751, %v753
    %v755 = vsel %vm747, %v734, %v737
    %v756 = vsel %vm750, %v743, 920167782
    %v757 = vsel %vm749, %v740, %v756
    %v758 = vsel %vm748, %v755, %v757
    %v759 = vsel %vm747, %v737, %v740
    %v760 = vsel %vm750, %v746, 1326507024
    %v761 = vsel %vm749, %v743, %v760
    %v762 = vsel %vm748, %v759, %v761
    %v763 = vshll.u32 %v723, 8
    %v764 = vmul.u32.u64.compose %v763, %v762
    %v765 = vextract.low.u32 %v764
    %v766 = vextract.high.u32 %v764
    %v767 = vmul.u32.u64.compose %v763, %v758
    %v768 = vextract.low.u32 %v767
    %v769 = vextract.high.u32 %v767
    %v770 = vmul.u32 %v763, %v754
    %v771 = vadd.s32 %v766, %v768
    %vm772 = vc.u32 %v766, %v768
    %v773 = vadd.s32 %v769, 1
    %v774 = vsel %vm772, %v773, %v769
    %v775 = vadd.s32 %v770, %v774
    %v776 = vadd.s32 %v775, 536870912
    %v777 = vshrl.u32 %v776, 30
    %v778 = vshll.u32 %v777, 30
    %v779 = vsub.s32 %v775, %v778
    %vm780 = vcmp.lt.s32.totalorder %v779, 0
    %v781 = vsub.s32 0, %v779
    %v782 = vsel %vm780, %v781, %v779
    %v783 = vclz %v782
    %v784 = vsub.s32 %v783, 2
    %vm785 = vcmp.gt.s32.totalorder 0, %v784
    %v786 = vsel %vm785, 0, %v784
    %v787 = vsub.s32 32, %v786
    %v788 = vshll.u32 %v779, %v786
    %v789 = vshrl.u32 %v771, %v787
    %v790 = vor.u32 %v788, %v789
    %v791 = vsub.s32 4294967266, %v786
    %v792 = vadd.s32 %v791, 127
    %v793 = vshll.u32 %v792, 23
    %v794 = vor.u32 4788187, %v793
    %v795 = vand.u32 2147483647, %v794
    %v797 = vcvt.s32.f32 %v790
    %v798 = vmul.f32 %v797, %v795
    %v799 = vxor.u32 %v798, 2147483648
    %v800 = vsel %vm717, %v799, %v798
    %v801 = vsub.s32 4, %v777
    %v802 = vsel %vm717, %v801, %v777
    %v803 = vsel %vm716, %v79, %v800
    %v804 = vsel %vm716, 0, %v802
    %v805 = vcosq.f32.pop %v803
    %v806 = vsinq.f32.pop %v803
    %vm807 = vweird.f32 %v79
    %v808 = vand.u32 %v804, 3
    %vm809 = vcmp.lt.s32.totalorder %v808, 2
    %vm810 = vcmp.eq.s32.totalorder %v808, 0
    %v811 = vxor.u32 %v806, 2147483648
    %v812 = vsel %vm810, %v805, %v811
    %vm813 = vcmp.eq.s32.totalorder %v808, 2
    %v814 = vxor.u32 %v805, 2147483648
    %v815 = vsel %vm813, %v814, %v806
    %v816 = vsel %vm809, %v812, %v815
    %v817 = vsel %vm807, nan, %v816
    %v818 = vand.u32 2147483647, %v80
    %vm819 = vcmp.le.f32.partialorder %v818, 0.7853982
    %vm820 = vcmp.lt.s32.totalorder %v80, 0
    %v821 = vand.u32 %v80, 2139095040
    %v822 = vshrl.u32 %v821, 23
    %v823 = vsub.s32 %v822, 127
    %v824 = vand.u32 2147483647, %v80
    %v825 = vand.u32 %v824, 8388607
    %v826 = vor.u32 %v825, 8388608
    %v827 = vsub.s32 0, %v826
    %v828 = vadd.s32 %v823, 1
    %vm829 = vcmp.gt.s32.totalorder %v828, 0
    %v830 = vsel %vm829, %v828, 0
    %v831 = vshrl.u32 %v830, 5
    %v832 = vand.u32 %v830, 31
    %v833 = vsub.s32 32, %v832
    %v834 = vshrl.u32 683565275, %v833
    %v835 = vshll.u32 683565275, %v832
    %v836 = vshrl.u32 2475754826, %v833
    %v837 = vor.u32 %v835, %v836
    %v838 = vshll.u32 2475754826, %v832
    %v839 = vshrl.u32 2131351028, %v833
    %v840 = vor.u32 %v838, %v839
    %v841 = vshll.u32 2131351028, %v832
    %v842 = vshrl.u32 2102212464, %v833
    %v843 = vor.u32 %v841, %v842
    %v844 = vshll.u32 2102212464, %v832
    %v845 = vshrl.u32 920167782, %v833
    %v846 = vor.u32 %v844, %v845
    %v847 = vshll.u32 920167782, %v832
    %v848 = vshrl.u32 1326507024, %v833
    %v849 = vor.u32 %v847, %v848
    %vm850 = vcmp.lt.s32.totalorder %v831, 1
    %vm851 = vcmp.lt.s32.totalorder %v831, 2
    %vm852 = vcmp.lt.s32.totalorder %v831, 3
    %vm853 = vcmp.lt.s32.totalorder %v831, 4
    %v854 = vsel %vm850, %v834, %v837
    %v855 = vsel %vm853, %v843, 2102212464
    %v856 = vsel %vm852, %v840, %v855
    %v857 = vsel %vm851, %v854, %v856
    %v858 = vsel %vm850, %v837, %v840
    %v859 = vsel %vm853, %v846, 920167782
    %v860 = vsel %vm852, %v843, %v859
    %v861 = vsel %vm851, %v858, %v860
    %v862 = vsel %vm850, %v840, %v843
    %v863 = vsel %vm853, %v849, 1326507024
    %v864 = vsel %vm852, %v846, %v863
    %v865 = vsel %vm851, %v862, %v864
    %v866 = vshll.u32 %v826, 8
    %v867 = vmul.u32.u64.compose %v866, %v865
    %v868 = vextract.low.u32 %v867
    %v869 = vextract.high.u32 %v867
    %v870 = vmul.u32.u64.compose %v866, %v861
    %v871 = vextract.low.u32 %v870
    %v872 = vextract.high.u32 %v870
    %v873 = vmul.u32 %v866, %v857
    %v874 = vadd.s32 %v869, %v871
    %vm875 = vc.u32 %v869, %v871
    %v876 = vadd.s32 %v872, 1
    %v877 = vsel %vm875, %v876, %v872
    %v878 = vadd.s32 %v873, %v877
    %v879 = vadd.s32 %v878, 536870912
    %v880 = vshrl.u32 %v879, 30
    %v881 = vshll.u32 %v880, 30
    %v882 = vsub.s32 %v878, %v881
    %vm883 = vcmp.lt.s32.totalorder %v882, 0
    %v884 = vsub.s32 0, %v882
    %v885 = vsel %vm883, %v884, %v882
    %v886 = vclz %v885
    %v887 = vsub.s32 %v886, 2
    %vm888 = vcmp.gt.s32.totalorder 0, %v887
    %v889 = vsel %vm888, 0, %v887
    %v890 = vsub.s32 32, %v889
    %v891 = vshll.u32 %v882, %v889
    %v892 = vshrl.u32 %v874, %v890
    %v893 = vor.u32 %v891, %v892
    %v894 = vsub.s32 4294967266, %v889
    %v895 = vadd.s32 %v894, 127
    %v896 = vshll.u32 %v895, 23
    %v897 = vor.u32 4788187, %v896
    %v898 = vand.u32 2147483647, %v897
    %v900 = vcvt.s32.f32 %v893
    %v901 = vmul.f32 %v900, %v898
    %v902 = vxor.u32 %v901, 2147483648
    %v903 = vsel %vm820, %v902, %v901
    %v904 = vsub.s32 4, %v880
    %v905 = vsel %vm820, %v904, %v880
    %v906 = vsel %vm819, %v80, %v903
    %v907 = vsel %vm819, 0, %v905
    %v908 = vcosq.f32.pop %v906
    %v909 = vsinq.f32.pop %v906
    %vm910 = vweird.f32 %v80
    %v911 = vand.u32 %v907, 3
    %vm912 = vcmp.lt.s32.totalorder %v911, 2
    %vm913 = vcmp.eq.s32.totalorder %v911, 0
    %v914 = vxor.u32 %v909, 2147483648
    %v915 = vsel %vm913, %v908, %v914
    %vm916 = vcmp.eq.s32.totalorder %v911, 2
    %v917 = vxor.u32 %v908, 2147483648
    %v918 = vsel %vm916, %v917, %v909
    %v919 = vsel %vm912, %v915, %v918
    %v920 = vsel %vm910, nan, %v919
    %v921 = vand.u32 2147483647, %v81
    %vm922 = vcmp.le.f32.partialorder %v921, 0.7853982
    %vm923 = vcmp.lt.s32.totalorder %v81, 0
    %v924 = vand.u32 %v81, 2139095040
    %v925 = vshrl.u32 %v924, 23
    %v926 = vsub.s32 %v925, 127
    %v927 = vand.u32 2147483647, %v81
    %v928 = vand.u32 %v927, 8388607
    %v929 = vor.u32 %v928, 8388608
    %v930 = vsub.s32 0, %v929
    %v931 = vadd.s32 %v926, 1
    %vm932 = vcmp.gt.s32.totalorder %v931, 0
    %v933 = vsel %vm932, %v931, 0
    %v934 = vshrl.u32 %v933, 5
    %v935 = vand.u32 %v933, 31
    %v936 = vsub.s32 32, %v935
    %v937 = vshrl.u32 683565275, %v936
    %v938 = vshll.u32 683565275, %v935
    %v939 = vshrl.u32 2475754826, %v936
    %v940 = vor.u32 %v938, %v939
    %v941 = vshll.u32 2475754826, %v935
    %v942 = vshrl.u32 2131351028, %v936
    %v943 = vor.u32 %v941, %v942
    %v944 = vshll.u32 2131351028, %v935
    %v945 = vshrl.u32 2102212464, %v936
    %v946 = vor.u32 %v944, %v945
    %v947 = vshll.u32 2102212464, %v935
    %v948 = vshrl.u32 920167782, %v936
    %v949 = vor.u32 %v947, %v948
    %v950 = vshll.u32 920167782, %v935
    %v951 = vshrl.u32 1326507024, %v936
    %v952 = vor.u32 %v950, %v951
    %vm953 = vcmp.lt.s32.totalorder %v934, 1
    %vm954 = vcmp.lt.s32.totalorder %v934, 2
    %vm955 = vcmp.lt.s32.totalorder %v934, 3
    %vm956 = vcmp.lt.s32.totalorder %v934, 4
    %v957 = vsel %vm953, %v937, %v940
    %v958 = vsel %vm956, %v946, 2102212464
    %v959 = vsel %vm955, %v943, %v958
    %v960 = vsel %vm954, %v957, %v959
    %v961 = vsel %vm953, %v940, %v943
    %v962 = vsel %vm956, %v949, 920167782
    %v963 = vsel %vm955, %v946, %v962
    %v964 = vsel %vm954, %v961, %v963
    %v965 = vsel %vm953, %v943, %v946
    %v966 = vsel %vm956, %v952, 1326507024
    %v967 = vsel %vm955, %v949, %v966
    %v968 = vsel %vm954, %v965, %v967
    %v969 = vshll.u32 %v929, 8
    %v970 = vmul.u32.u64.compose %v969, %v968
    %v971 = vextract.low.u32 %v970
    %v972 = vextract.high.u32 %v970
    %v973 = vmul.u32.u64.compose %v969, %v964
    %v974 = vextract.low.u32 %v973
    %v975 = vextract.high.u32 %v973
    %v976 = vmul.u32 %v969, %v960
    %v977 = vadd.s32 %v972, %v974
    %vm978 = vc.u32 %v972, %v974
    %v979 = vadd.s32 %v975, 1
    %v980 = vsel %vm978, %v979, %v975
    %v981 = vadd.s32 %v976, %v980
    %v982 = vadd.s32 %v981, 536870912
    %v983 = vshrl.u32 %v982, 30
    %v984 = vshll.u32 %v983, 30
    %v985 = vsub.s32 %v981, %v984
    %vm986 = vcmp.lt.s32.totalorder %v985, 0
    %v987 = vsub.s32 0, %v985
    %v988 = vsel %vm986, %v987, %v985
    %v989 = vclz %v988
    %v990 = vsub.s32 %v989, 2
    %vm991 = vcmp.gt.s32.totalorder 0, %v990
    %v992 = vsel %vm991, 0, %v990
    %v993 = vsub.s32 32, %v992
    %v994 = vshll.u32 %v985, %v992
    %v995 = vshrl.u32 %v977, %v993
    %v996 = vor.u32 %v994, %v995
    %v997 = vsub.s32 4294967266, %v992
    %v998 = vadd.s32 %v997, 127
    %v999 = vshll.u32 %v998, 23
    %v1000 = vor.u32 4788187, %v999
    %v1001 = vand.u32 2147483647, %v1000
    %v1003 = vcvt.s32.f32 %v996
    %v1004 = vmul.f32 %v1003, %v1001
    %v1005 = vxor.u32 %v1004, 2147483648
    %v1006 = vsel %vm923, %v1005, %v1004
    %v1007 = vsub.s32 4, %v983
    %v1008 = vsel %vm923, %v1007, %v983
    %v1009 = vsel %vm922, %v81, %v1006
    %v1010 = vsel %vm922, 0, %v1008
    %v1011 = vcosq.f32.pop %v1009
    %v1012 = vsinq.f32.pop %v1009
    %vm1013 = vweird.f32 %v81
    %v1014 = vand.u32 %v1010, 3
    %vm1015 = vcmp.lt.s32.totalorder %v1014, 2
    %vm1016 = vcmp.eq.s32.totalorder %v1014, 0
    %v1017 = vxor.u32 %v1012, 2147483648
    %v1018 = vsel %vm1016, %v1011, %v1017
    %vm1019 = vcmp.eq.s32.totalorder %v1014, 2
    %v1020 = vxor.u32 %v1011, 2147483648
    %v1021 = vsel %vm1019, %v1020, %v1012
    %v1022 = vsel %vm1015, %v1018, %v1021
    %v1023 = vsel %vm1013, nan, %v1022
    %v1024 = vand.u32 2147483647, %v82
    %vm1025 = vcmp.le.f32.partialorder %v1024, 0.7853982
    %vm1026 = vcmp.lt.s32.totalorder %v82, 0
    %v1027 = vand.u32 %v82, 2139095040
    %v1028 = vshrl.u32 %v1027, 23
    %v1029 = vsub.s32 %v1028, 127
    %v1030 = vand.u32 2147483647, %v82
    %v1031 = vand.u32 %v1030, 8388607
    %v1032 = vor.u32 %v1031, 8388608
    %v1033 = vsub.s32 0, %v1032
    %v1034 = vadd.s32 %v1029, 1
    %vm1035 = vcmp.gt.s32.totalorder %v1034, 0
    %v1036 = vsel %vm1035, %v1034, 0
    %v1037 = vshrl.u32 %v1036, 5
    %v1038 = vand.u32 %v1036, 31
    %v1039 = vsub.s32 32, %v1038
    %v1040 = vshrl.u32 683565275, %v1039
    %v1041 = vshll.u32 683565275, %v1038
    %v1042 = vshrl.u32 2475754826, %v1039
    %v1043 = vor.u32 %v1041, %v1042
    %v1044 = vshll.u32 2475754826, %v1038
    %v1045 = vshrl.u32 2131351028, %v1039
    %v1046 = vor.u32 %v1044, %v1045
    %v1047 = vshll.u32 2131351028, %v1038
    %v1048 = vshrl.u32 2102212464, %v1039
    %v1049 = vor.u32 %v1047, %v1048
    %v1050 = vshll.u32 2102212464, %v1038
    %v1051 = vshrl.u32 920167782, %v1039
    %v1052 = vor.u32 %v1050, %v1051
    %v1053 = vshll.u32 920167782, %v1038
    %v1054 = vshrl.u32 1326507024, %v1039
    %v1055 = vor.u32 %v1053, %v1054
    %vm1056 = vcmp.lt.s32.totalorder %v1037, 1
    %vm1057 = vcmp.lt.s32.totalorder %v1037, 2
    %vm1058 = vcmp.lt.s32.totalorder %v1037, 3
    %vm1059 = vcmp.lt.s32.totalorder %v1037, 4
    %v1060 = vsel %vm1056, %v1040, %v1043
    %v1061 = vsel %vm1059, %v1049, 2102212464
    %v1062 = vsel %vm1058, %v1046, %v1061
    %v1063 = vsel %vm1057, %v1060, %v1062
    %v1064 = vsel %vm1056, %v1043, %v1046
    %v1065 = vsel %vm1059, %v1052, 920167782
    %v1066 = vsel %vm1058, %v1049, %v1065
    %v1067 = vsel %vm1057, %v1064, %v1066
    %v1068 = vsel %vm1056, %v1046, %v1049
    %v1069 = vsel %vm1059, %v1055, 1326507024
    %v1070 = vsel %vm1058, %v1052, %v1069
    %v1071 = vsel %vm1057, %v1068, %v1070
    %v1072 = vshll.u32 %v1032, 8
    %v1073 = vmul.u32.u64.compose %v1072, %v1071
    %v1074 = vextract.low.u32 %v1073
    %v1075 = vextract.high.u32 %v1073
    %v1076 = vmul.u32.u64.compose %v1072, %v1067
    %v1077 = vextract.low.u32 %v1076
    %v1078 = vextract.high.u32 %v1076
    %v1079 = vmul.u32 %v1072, %v1063
    %v1080 = vadd.s32 %v1075, %v1077
    %vm1081 = vc.u32 %v1075, %v1077
    %v1082 = vadd.s32 %v1078, 1
    %v1083 = vsel %vm1081, %v1082, %v1078
    %v1084 = vadd.s32 %v1079, %v1083
    %v1085 = vadd.s32 %v1084, 536870912
    %v1086 = vshrl.u32 %v1085, 30
    %v1087 = vshll.u32 %v1086, 30
    %v1088 = vsub.s32 %v1084, %v1087
    %vm1089 = vcmp.lt.s32.totalorder %v1088, 0
    %v1090 = vsub.s32 0, %v1088
    %v1091 = vsel %vm1089, %v1090, %v1088
    %v1092 = vclz %v1091
    %v1093 = vsub.s32 %v1092, 2
    %vm1094 = vcmp.gt.s32.totalorder 0, %v1093
    %v1095 = vsel %vm1094, 0, %v1093
    %v1096 = vsub.s32 32, %v1095
    %v1097 = vshll.u32 %v1088, %v1095
    %v1098 = vshrl.u32 %v1080, %v1096
    %v1099 = vor.u32 %v1097, %v1098
    %v1100 = vsub.s32 4294967266, %v1095
    %v1101 = vadd.s32 %v1100, 127
    %v1102 = vshll.u32 %v1101, 23
    %v1103 = vor.u32 4788187, %v1102
    %v1104 = vand.u32 2147483647, %v1103
    %v1106 = vcvt.s32.f32 %v1099
    %v1107 = vmul.f32 %v1106, %v1104
    %v1108 = vxor.u32 %v1107, 2147483648
    %v1109 = vsel %vm1026, %v1108, %v1107
    %v1110 = vsub.s32 4, %v1086
    %v1111 = vsel %vm1026, %v1110, %v1086
    %v1112 = vsel %vm1025, %v82, %v1109
    %v1113 = vsel %vm1025, 0, %v1111
    %v1114 = vcosq.f32.pop %v1112
    %v1115 = vsinq.f32.pop %v1112
    %vm1116 = vweird.f32 %v82
    %v1117 = vand.u32 %v1113, 3
    %vm1118 = vcmp.lt.s32.totalorder %v1117, 2
    %vm1119 = vcmp.eq.s32.totalorder %v1117, 0
    %v1120 = vxor.u32 %v1115, 2147483648
    %v1121 = vsel %vm1119, %v1114, %v1120
    %vm1122 = vcmp.eq.s32.totalorder %v1117, 2
    %v1123 = vxor.u32 %v1114, 2147483648
    %v1124 = vsel %vm1122, %v1123, %v1115
    %v1125 = vsel %vm1118, %v1121, %v1124
    %v1126 = vsel %vm1116, nan, %v1125
    %v1127 = vand.u32 2147483647, %v83
    %vm1128 = vcmp.le.f32.partialorder %v1127, 0.7853982
    %vm1129 = vcmp.lt.s32.totalorder %v83, 0
    %v1130 = vand.u32 %v83, 2139095040
    %v1131 = vshrl.u32 %v1130, 23
    %v1132 = vsub.s32 %v1131, 127
    %v1133 = vand.u32 2147483647, %v83
    %v1134 = vand.u32 %v1133, 8388607
    %v1135 = vor.u32 %v1134, 8388608
    %v1136 = vsub.s32 0, %v1135
    %v1137 = vadd.s32 %v1132, 1
    %vm1138 = vcmp.gt.s32.totalorder %v1137, 0
    %v1139 = vsel %vm1138, %v1137, 0
    %v1140 = vshrl.u32 %v1139, 5
    %v1141 = vand.u32 %v1139, 31
    %v1142 = vsub.s32 32, %v1141
    %v1143 = vshrl.u32 683565275, %v1142
    %v1144 = vshll.u32 683565275, %v1141
    %v1145 = vshrl.u32 2475754826, %v1142
    %v1146 = vor.u32 %v1144, %v1145
    %v1147 = vshll.u32 2475754826, %v1141
    %v1148 = vshrl.u32 2131351028, %v1142
    %v1149 = vor.u32 %v1147, %v1148
    %v1150 = vshll.u32 2131351028, %v1141
    %v1151 = vshrl.u32 2102212464, %v1142
    %v1152 = vor.u32 %v1150, %v1151
    %v1153 = vshll.u32 2102212464, %v1141
    %v1154 = vshrl.u32 920167782, %v1142
    %v1155 = vor.u32 %v1153, %v1154
    %v1156 = vshll.u32 920167782, %v1141
    %v1157 = vshrl.u32 1326507024, %v1142
    %v1158 = vor.u32 %v1156, %v1157
    %vm1159 = vcmp.lt.s32.totalorder %v1140, 1
    %vm1160 = vcmp.lt.s32.totalorder %v1140, 2
    %vm1161 = vcmp.lt.s32.totalorder %v1140, 3
    %vm1162 = vcmp.lt.s32.totalorder %v1140, 4
    %v1163 = vsel %vm1159, %v1143, %v1146
    %v1164 = vsel %vm1162, %v1152, 2102212464
    %v1165 = vsel %vm1161, %v1149, %v1164
    %v1166 = vsel %vm1160, %v1163, %v1165
    %v1167 = vsel %vm1159, %v1146, %v1149
    %v1168 = vsel %vm1162, %v1155, 920167782
    %v1169 = vsel %vm1161, %v1152, %v1168
    %v1170 = vsel %vm1160, %v1167, %v1169
    %v1171 = vsel %vm1159, %v1149, %v1152
    %v1172 = vsel %vm1162, %v1158, 1326507024
    %v1173 = vsel %vm1161, %v1155, %v1172
    %v1174 = vsel %vm1160, %v1171, %v1173
    %v1175 = vshll.u32 %v1135, 8
    %v1176 = vmul.u32.u64.compose %v1175, %v1174
    %v1177 = vextract.low.u32 %v1176
    %v1178 = vextract.high.u32 %v1176
    %v1179 = vmul.u32.u64.compose %v1175, %v1170
    %v1180 = vextract.low.u32 %v1179
    %v1181 = vextract.high.u32 %v1179
    %v1182 = vmul.u32 %v1175, %v1166
    %v1183 = vadd.s32 %v1178, %v1180
    %vm1184 = vc.u32 %v1178, %v1180
    %v1185 = vadd.s32 %v1181, 1
    %v1186 = vsel %vm1184, %v1185, %v1181
    %v1187 = vadd.s32 %v1182, %v1186
    %v1188 = vadd.s32 %v1187, 536870912
    %v1189 = vshrl.u32 %v1188, 30
    %v1190 = vshll.u32 %v1189, 30
    %v1191 = vsub.s32 %v1187, %v1190
    %vm1192 = vcmp.lt.s32.totalorder %v1191, 0
    %v1193 = vsub.s32 0, %v1191
    %v1194 = vsel %vm1192, %v1193, %v1191
    %v1195 = vclz %v1194
    %v1196 = vsub.s32 %v1195, 2
    %vm1197 = vcmp.gt.s32.totalorder 0, %v1196
    %v1198 = vsel %vm1197, 0, %v1196
    %v1199 = vsub.s32 32, %v1198
    %v1200 = vshll.u32 %v1191, %v1198
    %v1201 = vshrl.u32 %v1183, %v1199
    %v1202 = vor.u32 %v1200, %v1201
    %v1203 = vsub.s32 4294967266, %v1198
    %v1204 = vadd.s32 %v1203, 127
    %v1205 = vshll.u32 %v1204, 23
    %v1206 = vor.u32 4788187, %v1205
    %v1207 = vand.u32 2147483647, %v1206
    %v1209 = vcvt.s32.f32 %v1202
    %v1210 = vmul.f32 %v1209, %v1207
    %v1211 = vxor.u32 %v1210, 2147483648
    %v1212 = vsel %vm1129, %v1211, %v1210
    %v1213 = vsub.s32 4, %v1189
    %v1214 = vsel %vm1129, %v1213, %v1189
    %v1215 = vsel %vm1128, %v83, %v1212
    %v1216 = vsel %vm1128, 0, %v1214
    %v1217 = vcosq.f32.pop %v1215
    %v1218 = vsinq.f32.pop %v1215
    %vm1219 = vweird.f32 %v83
    %v1220 = vand.u32 %v1216, 3
    %vm1221 = vcmp.lt.s32.totalorder %v1220, 2
    %vm1222 = vcmp.eq.s32.totalorder %v1220, 0
    %v1223 = vxor.u32 %v1218, 2147483648
    %v1224 = vsel %vm1222, %v1217, %v1223
    %vm1225 = vcmp.eq.s32.totalorder %v1220, 2
    %v1226 = vxor.u32 %v1217, 2147483648
    %v1227 = vsel %vm1225, %v1226, %v1218
    %v1228 = vsel %vm1221, %v1224, %v1227
    %v1229 = vsel %vm1219, nan, %v1228
    %v1230 = vand.u32 2147483647, %v84
    %vm1231 = vcmp.le.f32.partialorder %v1230, 0.7853982
    %vm1232 = vcmp.lt.s32.totalorder %v84, 0
    %v1233 = vand.u32 %v84, 2139095040
    %v1234 = vshrl.u32 %v1233, 23
    %v1235 = vsub.s32 %v1234, 127
    %v1236 = vand.u32 2147483647, %v84
    %v1237 = vand.u32 %v1236, 8388607
    %v1238 = vor.u32 %v1237, 8388608
    %v1239 = vsub.s32 0, %v1238
    %v1240 = vadd.s32 %v1235, 1
    %vm1241 = vcmp.gt.s32.totalorder %v1240, 0
    %v1242 = vsel %vm1241, %v1240, 0
    %v1243 = vshrl.u32 %v1242, 5
    %v1244 = vand.u32 %v1242, 31
    %v1245 = vsub.s32 32, %v1244
    %v1246 = vshrl.u32 683565275, %v1245
    %v1247 = vshll.u32 683565275, %v1244
    %v1248 = vshrl.u32 2475754826, %v1245
    %v1249 = vor.u32 %v1247, %v1248
    %v1250 = vshll.u32 2475754826, %v1244
    %v1251 = vshrl.u32 2131351028, %v1245
    %v1252 = vor.u32 %v1250, %v1251
    %v1253 = vshll.u32 2131351028, %v1244
    %v1254 = vshrl.u32 2102212464, %v1245
    %v1255 = vor.u32 %v1253, %v1254
    %v1256 = vshll.u32 2102212464, %v1244
    %v1257 = vshrl.u32 920167782, %v1245
    %v1258 = vor.u32 %v1256, %v1257
    %v1259 = vshll.u32 920167782, %v1244
    %v1260 = vshrl.u32 1326507024, %v1245
    %v1261 = vor.u32 %v1259, %v1260
    %vm1262 = vcmp.lt.s32.totalorder %v1243, 1
    %vm1263 = vcmp.lt.s32.totalorder %v1243, 2
    %vm1264 = vcmp.lt.s32.totalorder %v1243, 3
    %vm1265 = vcmp.lt.s32.totalorder %v1243, 4
    %v1266 = vsel %vm1262, %v1246, %v1249
    %v1267 = vsel %vm1265, %v1255, 2102212464
    %v1268 = vsel %vm1264, %v1252, %v1267
    %v1269 = vsel %vm1263, %v1266, %v1268
    %v1270 = vsel %vm1262, %v1249, %v1252
    %v1271 = vsel %vm1265, %v1258, 920167782
    %v1272 = vsel %vm1264, %v1255, %v1271
    %v1273 = vsel %vm1263, %v1270, %v1272
    %v1274 = vsel %vm1262, %v1252, %v1255
    %v1275 = vsel %vm1265, %v1261, 1326507024
    %v1276 = vsel %vm1264, %v1258, %v1275
    %v1277 = vsel %vm1263, %v1274, %v1276
    %v1278 = vshll.u32 %v1238, 8
    %v1279 = vmul.u32.u64.compose %v1278, %v1277
    %v1280 = vextract.low.u32 %v1279
    %v1281 = vextract.high.u32 %v1279
    %v1282 = vmul.u32.u64.compose %v1278, %v1273
    %v1283 = vextract.low.u32 %v1282
    %v1284 = vextract.high.u32 %v1282
    %v1285 = vmul.u32 %v1278, %v1269
    %v1286 = vadd.s32 %v1281, %v1283
    %vm1287 = vc.u32 %v1281, %v1283
    %v1288 = vadd.s32 %v1284, 1
    %v1289 = vsel %vm1287, %v1288, %v1284
    %v1290 = vadd.s32 %v1285, %v1289
    %v1291 = vadd.s32 %v1290, 536870912
    %v1292 = vshrl.u32 %v1291, 30
    %v1293 = vshll.u32 %v1292, 30
    %v1294 = vsub.s32 %v1290, %v1293
    %vm1295 = vcmp.lt.s32.totalorder %v1294, 0
    %v1296 = vsub.s32 0, %v1294
    %v1297 = vsel %vm1295, %v1296, %v1294
    %v1298 = vclz %v1297
    %v1299 = vsub.s32 %v1298, 2
    %vm1300 = vcmp.gt.s32.totalorder 0, %v1299
    %v1301 = vsel %vm1300, 0, %v1299
    %v1302 = vsub.s32 32, %v1301
    %v1303 = vshll.u32 %v1294, %v1301
    %v1304 = vshrl.u32 %v1286, %v1302
    %v1305 = vor.u32 %v1303, %v1304
    %v1306 = vsub.s32 4294967266, %v1301
    %v1307 = vadd.s32 %v1306, 127
    %v1308 = vshll.u32 %v1307, 23
    %v1309 = vor.u32 4788187, %v1308
    %v1310 = vand.u32 2147483647, %v1309
    %v1312 = vcvt.s32.f32 %v1305
    %v1313 = vmul.f32 %v1312, %v1310
    %v1314 = vxor.u32 %v1313, 2147483648
    %v1315 = vsel %vm1232, %v1314, %v1313
    %v1316 = vsub.s32 4, %v1292
    %v1317 = vsel %vm1232, %v1316, %v1292
    %v1318 = vsel %vm1231, %v84, %v1315
    %v1319 = vsel %vm1231, 0, %v1317
    %v1320 = vcosq.f32.pop %v1318
    %v1321 = vsinq.f32.pop %v1318
    %vm1322 = vweird.f32 %v84
    %v1323 = vand.u32 %v1319, 3
    %vm1324 = vcmp.lt.s32.totalorder %v1323, 2
    %vm1325 = vcmp.eq.s32.totalorder %v1323, 0
    %v1326 = vxor.u32 %v1321, 2147483648
    %v1327 = vsel %vm1325, %v1320, %v1326
    %vm1328 = vcmp.eq.s32.totalorder %v1323, 2
    %v1329 = vxor.u32 %v1320, 2147483648
    %v1330 = vsel %vm1328, %v1329, %v1321
    %v1331 = vsel %vm1324, %v1327, %v1330
    %v1332 = vsel %vm1322, nan, %v1331
    %vm1339 = vcmask 1046528
    %v1340 = vrot.slane %v817, 1
    %v1341 = vrot.slane %v1023, 1
    %v1342 = vsel %vm1339, %v1340, %v1341
    %v1343 = vrot.slane %v920, 1
    %v1344 = vrot.slane %v1126, 1
    %v1345 = vsel %vm1339, %v1343, %v1344
    %v1346 = vrot.slane %v1229, 1
    %v1347 = vsel %vm1339, %v1341, %v1346
    %v1348 = vrot.slane %v1332, 1
    %v1349 = vsel %vm1339, %v1344, %v1348
    %1356 = vst [vmem:[#allocation2 + $0x20] sm:$0xfc] %v1342
    %1357 = vst [vmem:[#allocation2 + $0x28] sm:$0xfc] %v1345
    %1358 = vst [vmem:[#allocation2 + $0x30] sm:$0xff] %v1347
    %1359 = vst [vmem:[#allocation2 + $0x38] sm:$0xff] %v1349
    %1360 = vst [vmem:[#allocation2 + $0x40] sm:$0x1] %v1346
    %1361 = vst [vmem:[#allocation2 + $0x48] sm:$0x1] %v1348
    %v1362 = vld [vmem:[#allocation3] sm:$0x3]
    %v1363 = vlaneseq
    %vm1364 = vcmp.ge.s32.totalorder %v1363, 0
    %vm1365 = vcmp.lt.s32.totalorder %v1363, 256
    %vm1366 = vmand %vm1364, %vm1365
    %s1367 = scalar_lea.vmem [#allocation2], 65
    %1368 = vst.msk [vmem:[%s1367] ss:$8 sm:$0x3] %vm1366, %v1362
    %1369 = vst.msk [vmem:[%s1367] ss:$8 sm:$0x0] %vm1366, %v1362
    %v1370 = vld [vmem:[%s2] sm:$0xff]
    %v1371 = vld [vmem:[%s2 + $0x8] sm:$0xff]
    %v1372 = vld [vmem:[%s2 + $0x10] sm:$0xff]
    %v1373 = vld [vmem:[%s2 + $0x18] sm:$0xff]
    %v1374 = vld [vmem:[#allocation2] sm:$0xff]
    %v1375 = vld [vmem:[#allocation2 + $0x8] sm:$0xff]
    %v1376 = vld [vmem:[#allocation2 + $0x10] sm:$0xff]
    %v1377 = vld [vmem:[#allocation2 + $0x18] sm:$0xff]
    %v1378 = vld [vmem:[#allocation2 + $0x20] sm:$0xff]
    %v1379 = vld [vmem:[#allocation2 + $0x28] sm:$0xff]
    %v1380 = vld [vmem:[#allocation2 + $0x30] sm:$0xff]
    %v1381 = vld [vmem:[#allocation2 + $0x38] sm:$0xff]
    %v1382 = vld [vmem:[#allocation2 + $0x40] sm:$0x3]
    %v1383 = vld [vmem:[#allocation2 + $0x48] sm:$0x3]
    %v1384 = vld [vmem:[%s3] sm:$0xff]
    %v1385 = vld [vmem:[%s3 + $0x8] sm:$0xff]
    %v1386 = vld [vmem:[%s3 + $0x10] sm:$0xff]
    %v1387 = vld [vmem:[%s3 + $0x18] sm:$0xff]
    %1389 = vset.pattern.permute.xlu0 0
    %1390 = vperm.xlu0 %1389, %v1384
    %v1391 = vpop.permute.xlu0 %1390
    %1394 = vset.pattern.permute.xlu0 0
    %1395 = vperm.xlu0 %1394, %v1385
    %v1396 = vpop.permute.xlu0 %1395
    %1399 = vset.pattern.permute.xlu0 0
    %1400 = vperm.xlu0 %1399, %v1386
    %v1401 = vpop.permute.xlu0 %1400
    %1404 = vset.pattern.permute.xlu0 0
    %1405 = vperm.xlu0 %1404, %v1387
    %v1406 = vpop.permute.xlu0 %1405
    %vm1408 = vcmask 277504
    %v1410 = vsel %vm1408, %v1370, 0
    %v1413 = vsel %vm1408, %v1371, 0
    %v1416 = vsel %vm1408, %v1372, 0
    %v1419 = vsel %vm1408, %v1373, 0
    %vm1421 = vcmask 1041408
    %v1423 = vsel %vm1421, %v1382, 0
    %v1426 = vsel %vm1421, %v1383, 0
    %v1428 = vand.u32 %v1375, 4294901760
    %1429 = vmatprep.subr.mxu0 %v1428
    %v1430 = vand.u32 %v1374, 4294901760
    %1431 = vmatpush1.msra.mxu0 %v1430
    %v1432 = vand.u32 %v1377, 4294901760
    %1433 = vmatprep.subr.mxu0 %v1432
    %v1434 = vand.u32 %v1376, 4294901760
    %1435 = vmatpush1.msra.mxu0 %v1434
    %v1436 = vand.u32 %v1379, 4294901760
    %1437 = vmatprep.subr.mxu0 %v1436
    %v1438 = vand.u32 %v1378, 4294901760
    %1439 = vmatpush1.msra.mxu0 %v1438
    %v1440 = vand.u32 %v1381, 4294901760
    %1441 = vmatprep.subr.mxu0 %v1440
    %v1442 = vand.u32 %v1380, 4294901760
    %1443 = vmatpush1.msra.mxu0 %v1442
    %v1444 = vand.u32 %v1426, 4294901760
    %1445 = vmatprep.subr.mxu0 %v1444
    %v1446 = vand.u32 %v1423, 4294901760
    %1447 = vmatpush1.msra.mxu0 %v1446
    %1448 = vmatprep.subr.mxu0 0.0
    %1449 = vmatpush1.msra.mxu0 0.0
    %1450 = vmatprep.subr.mxu0 0.0
    %1451 = vmatpush1.msra.mxu0 0.0
    %1452 = vmatprep.subr.mxu0 0.0
    %1453 = vmatpush1.msra.mxu0 0.0
    %1454 = vmatprep.subr.mxu0 0.0
    %1455 = vmatpush1.msra.mxu0 0.0
    %1456 = vmatprep.subr.mxu0 0.0
    %1457 = vmatpush1.msra.mxu0 0.0
    %1458 = vmatprep.subr.mxu0 0.0
    %1459 = vmatpush1.msra.mxu0 0.0
    %1460 = vmatprep.subr.mxu0 0.0
    %1461 = vmatpush1.msra.mxu0 0.0
    %1462 = vmatprep.subr.mxu0 0.0
    %1463 = vmatpush1.msra.mxu0 0.0
    %1464 = vmatprep.subr.mxu0 0.0
    %1465 = vmatpush1.msra.mxu0 0.0
    %1466 = vmatprep.subr.mxu0 0.0
    %1467 = vmatpush1.msra.mxu0 0.0
    %1468 = vmatprep.subr.mxu0 0.0
    %1469 = vmatpush1.msra.mxu0 0.0
    %1470 = vmatprep.subr.mxu0 0.0
    %1471 = vmatpush1.msra.mxu0 0.0
    %1472 = vmatprep.subr.mxu0 0.0
    %1473 = vmatpush1.msra.mxu0 0.0
    %1474 = vmatprep.subr.mxu0 0.0
    %1475 = vmatpush1.msra.mxu0 0.0
    %1476 = vmatprep.subr.mxu0 0.0
    %1477 = vmatpush1.msra.mxu0 0.0
    %1478 = vmatprep.subr.mxu0 0.0
    %1479 = vmatpush1.msra.mxu0 0.0
    %1480 = vmatprep.subr.mxu0 0.0
    %1481 = vmatpush1.msra.mxu0 0.0
    %1482 = vmatprep.subr.mxu0 0.0
    %1483 = vmatpush1.msra.mxu0 0.0
    %1484 = vmatprep.subr.mxu0 0.0
    %1485 = vmatpush1.msra.mxu0 0.0
    %1486 = vmatprep.subr.mxu0 0.0
    %1487 = vmatpush1.msra.mxu0 0.0
    %1488 = vmatprep.subr.mxu0 0.0
    %1489 = vmatpush1.msra.mxu0 0.0
    %1490 = vmatprep.subr.mxu0 0.0
    %1491 = vmatpush1.msra.mxu0 0.0
    %1492 = vmatprep.subr.mxu0 0.0
    %1493 = vmatpush1.msra.mxu0 0.0
    %1494 = vmatprep.subr.mxu0 0.0
    %1495 = vmatpush1.msra.mxu0 0.0
    %1496 = vmatprep.subr.mxu0 0.0
    %1497 = vmatpush1.msra.mxu0 0.0
    %1498 = vmatprep.subr.mxu0 0.0
    %1499 = vmatpush1.msra.mxu0 0.0
    %1500 = vmatprep.subr.mxu0 0.0
    %1501 = vmatpush1.msra.mxu0 0.0
    %1502 = vmatprep.mubr.f32.mxu0 0.0
    %v1503 = vand.u32 %v1410, 4294901760
    %v1504 = vsub.f32 %v1410, %v1503
    %v1505 = vand.u32 %v1504, 4294901760
    %v1506 = vsub.f32 %v1504, %v1505
    %v1507 = vand.u32 %v1506, 4294901760
    %1508 = vmatmul.mubr.f32.gmra.mrb[0].mxu0 %v1507
    %v1509 = vpop.f32.mrb[0].mxu0
    %v1510 = vadd.f32 %v1391, %v1509
    %v1511 = vpop.f32.mrb[0].mxu0
    %v1512 = vadd.f32 %v1391, %v1511
    %1513 = vmatprep.mubr.f32.mxu0 0.0
    %v1514 = vand.u32 %v1413, 4294901760
    %v1515 = vsub.f32 %v1413, %v1514
    %v1516 = vand.u32 %v1515, 4294901760
    %v1517 = vsub.f32 %v1515, %v1516
    %v1518 = vand.u32 %v1517, 4294901760
    %1519 = vmatmul.mubr.f32.gmra.mrb[0].mxu0 %v1518
    %v1520 = vpop.f32.mrb[0].mxu0
    %v1521 = vadd.f32 %v1396, %v1520
    %v1522 = vpop.f32.mrb[0].mxu0
    %v1523 = vadd.f32 %v1396, %v1522
    %1524 = vmatprep.mubr.f32.mxu0 0.0
    %v1525 = vand.u32 %v1416, 4294901760
    %v1526 = vsub.f32 %v1416, %v1525
    %v1527 = vand.u32 %v1526, 4294901760
    %v1528 = vsub.f32 %v1526, %v1527
    %v1529 = vand.u32 %v1528, 4294901760
    %1530 = vmatmul.mubr.f32.gmra.mrb[0].mxu0 %v1529
    %v1531 = vpop.f32.mrb[0].mxu0
    %v1532 = vadd.f32 %v1401, %v1531
    %v1533 = vpop.f32.mrb[0].mxu0
    %v1534 = vadd.f32 %v1401, %v1533
    %1535 = vmatprep.mubr.f32.mxu0 0.0
    %v1536 = vand.u32 %v1419, 4294901760
    %v1537 = vsub.f32 %v1419, %v1536
    %v1538 = vand.u32 %v1537, 4294901760
    %v1539 = vsub.f32 %v1537, %v1538
    %v1540 = vand.u32 %v1539, 4294901760
    %1541 = vmatmul.mubr.f32.gmra.mrb[0].mxu0 %v1540
    %v1542 = vpop.f32.mrb[0].mxu0
    %v1543 = vadd.f32 %v1406, %v1542
    %v1544 = vpop.f32.mrb[0].mxu0
    %v1545 = vadd.f32 %v1406, %v1544
    %1546 = vdwg.mxu0
    %v1547 = vand.u32 %v1375, 4294901760
    %v1548 = vsub.f32 %v1375, %v1547
    %v1549 = vand.u32 %v1548, 4294901760
    %v1550 = vsub.f32 %v1548, %v1549
    %v1551 = vand.u32 %v1550, 4294901760
    %1552 = vmatprep.subr.mxu0 %v1551
    %v1553 = vand.u32 %v1374, 4294901760
    %v1554 = vsub.f32 %v1374, %v1553
    %v1555 = vand.u32 %v1554, 4294901760
    %v1556 = vsub.f32 %v1554, %v1555
    %v1557 = vand.u32 %v1556, 4294901760
    %1558 = vmatpush1.msra.mxu0 %v1557
    %v1559 = vand.u32 %v1377, 4294901760
    %v1560 = vsub.f32 %v1377, %v1559
    %v1561 = vand.u32 %v1560, 4294901760
    %v1562 = vsub.f32 %v1560, %v1561
    %v1563 = vand.u32 %v1562, 4294901760
    %1564 = vmatprep.subr.mxu0 %v1563
    %v1565 = vand.u32 %v1376, 4294901760
    %v1566 = vsub.f32 %v1376, %v1565
    %v1567 = vand.u32 %v1566, 4294901760
    %v1568 = vsub.f32 %v1566, %v1567
    %v1569 = vand.u32 %v1568, 4294901760
    %1570 = vmatpush1.msra.mxu0 %v1569
    %v1571 = vand.u32 %v1379, 4294901760
    %v1572 = vsub.f32 %v1379, %v1571
    %v1573 = vand.u32 %v1572, 4294901760
    %v1574 = vsub.f32 %v1572, %v1573
    %v1575 = vand.u32 %v1574, 4294901760
    %1576 = vmatprep.subr.mxu0 %v1575
    %v1577 = vand.u32 %v1378, 4294901760
    %v1578 = vsub.f32 %v1378, %v1577
    %v1579 = vand.u32 %v1578, 4294901760
    %v1580 = vsub.f32 %v1578, %v1579
    %v1581 = vand.u32 %v1580, 4294901760
    %1582 = vmatpush1.msra.mxu0 %v1581
    %v1583 = vand.u32 %v1381, 4294901760
    %v1584 = vsub.f32 %v1381, %v1583
    %v1585 = vand.u32 %v1584, 4294901760
    %v1586 = vsub.f32 %v1584, %v1585
    %v1587 = vand.u32 %v1586, 4294901760
    %1588 = vmatprep.subr.mxu0 %v1587
    %v1589 = vand.u32 %v1380, 4294901760
    %v1590 = vsub.f32 %v1380, %v1589
    %v1591 = vand.u32 %v1590, 4294901760
    %v1592 = vsub.f32 %v1590, %v1591
    %v1593 = vand.u32 %v1592, 4294901760
    %1594 = vmatpush1.msra.mxu0 %v1593
    %v1595 = vand.u32 %v1426, 4294901760
    %v1596 = vsub.f32 %v1426, %v1595
    %v1597 = vand.u32 %v1596, 4294901760
    %v1598 = vsub.f32 %v1596, %v1597
    %v1599 = vand.u32 %v1598, 4294901760
    %1600 = vmatprep.subr.mxu0 %v1599
    %v1601 = vand.u32 %v1423, 4294901760
    %v1602 = vsub.f32 %v1423, %v1601
    %v1603 = vand.u32 %v1602, 4294901760
    %v1604 = vsub.f32 %v1602, %v1603
    %v1605 = vand.u32 %v1604, 4294901760
    %1606 = vmatpush1.msra.mxu0 %v1605
    %1607 = vmatprep.subr.mxu0 0.0
    %1608 = vmatpush1.msra.mxu0 0.0
    %1609 = vmatprep.subr.mxu0 0.0
    %1610 = vmatpush1.msra.mxu0 0.0
    %1611 = vmatprep.subr.mxu0 0.0
    %1612 = vmatpush1.msra.mxu0 0.0
    %1613 = vmatprep.subr.mxu0 0.0
    %1614 = vmatpush1.msra.mxu0 0.0
    %1615 = vmatprep.subr.mxu0 0.0
    %1616 = vmatpush1.msra.mxu0 0.0
    %1617 = vmatprep.subr.mxu0 0.0
    %1618 = vmatpush1.msra.mxu0 0.0
    %1619 = vmatprep.subr.mxu0 0.0
    %1620 = vmatpush1.msra.mxu0 0.0
    %1621 = vmatprep.subr.mxu0 0.0
    %1622 = vmatpush1.msra.mxu0 0.0
    %1623 = vmatprep.subr.mxu0 0.0
    %1624 = vmatpush1.msra.mxu0 0.0
    %1625 = vmatprep.subr.mxu0 0.0
    %1626 = vmatpush1.msra.mxu0 0.0
    %1627 = vmatprep.subr.mxu0 0.0
    %1628 = vmatpush1.msra.mxu0 0.0
    %1629 = vmatprep.subr.mxu0 0.0
    %1630 = vmatpush1.msra.mxu0 0.0
    %1631 = vmatprep.subr.mxu0 0.0
    %1632 = vmatpush1.msra.mxu0 0.0
    %1633 = vmatprep.subr.mxu0 0.0
    %1634 = vmatpush1.msra.mxu0 0.0
    %1635 = vmatprep.subr.mxu0 0.0
    %1636 = vmatpush1.msra.mxu0 0.0
    %1637 = vmatprep.subr.mxu0 0.0
    %1638 = vmatpush1.msra.mxu0 0.0
    %1639 = vmatprep.subr.mxu0 0.0
    %1640 = vmatpush1.msra.mxu0 0.0
    %1641 = vmatprep.subr.mxu0 0.0
    %1642 = vmatpush1.msra.mxu0 0.0
    %1643 = vmatprep.subr.mxu0 0.0
    %1644 = vmatpush1.msra.mxu0 0.0
    %1645 = vmatprep.subr.mxu0 0.0
    %1646 = vmatpush1.msra.mxu0 0.0
    %1647 = vmatprep.subr.mxu0 0.0
    %1648 = vmatpush1.msra.mxu0 0.0
    %1649 = vmatprep.subr.mxu0 0.0
    %1650 = vmatpush1.msra.mxu0 0.0
    %1651 = vmatprep.subr.mxu0 0.0
    %1652 = vmatpush1.msra.mxu0 0.0
    %1653 = vmatprep.subr.mxu0 0.0
    %1654 = vmatpush1.msra.mxu0 0.0
    %1655 = vmatprep.subr.mxu0 0.0
    %1656 = vmatpush1.msra.mxu0 0.0
    %1657 = vmatprep.subr.mxu0 0.0
    %1658 = vmatpush1.msra.mxu0 0.0
    %1659 = vmatprep.subr.mxu0 0.0
    %1660 = vmatpush1.msra.mxu0 0.0
    %1661 = vmatprep.mubr.f32.mxu0 0.0
    %v1662 = vand.u32 %v1410, 4294901760
    %1663 = vmatmul.mubr.f32.gmra.mrb[0].mxu0 %v1662
    %v1664 = vpop.f32.mrb[0].mxu0
    %v1665 = vadd.f32 %v1510, %v1664
    %v1666 = vpop.f32.mrb[0].mxu0
    %v1667 = vadd.f32 %v1512, %v1666
    %1668 = vmatprep.mubr.f32.mxu0 0.0
    %v1669 = vand.u32 %v1413, 4294901760
    %1670 = vmatmul.mubr.f32.gmra.mrb[0].mxu0 %v1669
    %v1671 = vpop.f32.mrb[0].mxu0
    %v1672 = vadd.f32 %v1521, %v1671
    %v1673 = vpop.f32.mrb[0].mxu0
    %v1674 = vadd.f32 %v1523, %v1673
    %1675 = vmatprep.mubr.f32.mxu0 0.0
    %v1676 = vand.u32 %v1416, 4294901760
    %1677 = vmatmul.mubr.f32.gmra.mrb[0].mxu0 %v1676
    %v1678 = vpop.f32.mrb[0].mxu0
    %v1679 = vadd.f32 %v1532, %v1678
    %v1680 = vpop.f32.mrb[0].mxu0
    %v1681 = vadd.f32 %v1534, %v1680
    %1682 = vmatprep.mubr.f32.mxu0 0.0
    %v1683 = vand.u32 %v1419, 4294901760
    %1684 = vmatmul.mubr.f32.gmra.mrb[0].mxu0 %v1683
    %v1685 = vpop.f32.mrb[0].mxu0
    %v1686 = vadd.f32 %v1543, %v1685
    %v1687 = vpop.f32.mrb[0].mxu0
    %v1688 = vadd.f32 %v1545, %v1687
    %1689 = vdwg.mxu0
    %v1690 = vand.u32 %v1375, 4294901760
    %v1691 = vsub.f32 %v1375, %v1690
    %1692 = vmatprep.subr.mxu0 %v1691
    %v1693 = vand.u32 %v1374, 4294901760
    %v1694 = vsub.f32 %v1374, %v1693
    %1695 = vmatpush1.msra.mxu0 %v1694
    %v1696 = vand.u32 %v1377, 4294901760
    %v1697 = vsub.f32 %v1377, %v1696
    %1698 = vmatprep.subr.mxu0 %v1697
    %v1699 = vand.u32 %v1376, 4294901760
    %v1700 = vsub.f32 %v1376, %v1699
    %1701 = vmatpush1.msra.mxu0 %v1700
    %v1702 = vand.u32 %v1379, 4294901760
    %v1703 = vsub.f32 %v1379, %v1702
    %1704 = vmatprep.subr.mxu0 %v1703
    %v1705 = vand.u32 %v1378, 4294901760
    %v1706 = vsub.f32 %v1378, %v1705
    %1707 = vmatpush1.msra.mxu0 %v1706
    %v1708 = vand.u32 %v1381, 4294901760
    %v1709 = vsub.f32 %v1381, %v1708
    %1710 = vmatprep.subr.mxu0 %v1709
    %v1711 = vand.u32 %v1380, 4294901760
    %v1712 = vsub.f32 %v1380, %v1711
    %1713 = vmatpush1.msra.mxu0 %v1712
    %v1714 = vand.u32 %v1426, 4294901760
    %v1715 = vsub.f32 %v1426, %v1714
    %1716 = vmatprep.subr.mxu0 %v1715
    %v1717 = vand.u32 %v1423, 4294901760
    %v1718 = vsub.f32 %v1423, %v1717
    %1719 = vmatpush1.msra.mxu0 %v1718
    %1720 = vmatprep.subr.mxu0 0.0
    %1721 = vmatpush1.msra.mxu0 0.0
    %1722 = vmatprep.subr.mxu0 0.0
    %1723 = vmatpush1.msra.mxu0 0.0
    %1724 = vmatprep.subr.mxu0 0.0
    %1725 = vmatpush1.msra.mxu0 0.0
    %1726 = vmatprep.subr.mxu0 0.0
    %1727 = vmatpush1.msra.mxu0 0.0
    %1728 = vmatprep.subr.mxu0 0.0
    %1729 = vmatpush1.msra.mxu0 0.0
    %1730 = vmatprep.subr.mxu0 0.0
    %1731 = vmatpush1.msra.mxu0 0.0
    %1732 = vmatprep.subr.mxu0 0.0
    %1733 = vmatpush1.msra.mxu0 0.0
    %1734 = vmatprep.subr.mxu0 0.0
    %1735 = vmatpush1.msra.mxu0 0.0
    %1736 = vmatprep.subr.mxu0 0.0
    %1737 = vmatpush1.msra.mxu0 0.0
    %1738 = vmatprep.subr.mxu0 0.0
    %1739 = vmatpush1.msra.mxu0 0.0
    %1740 = vmatprep.subr.mxu0 0.0
    %1741 = vmatpush1.msra.mxu0 0.0
    %1742 = vmatprep.subr.mxu0 0.0
    %1743 = vmatpush1.msra.mxu0 0.0
    %1744 = vmatprep.subr.mxu0 0.0
    %1745 = vmatpush1.msra.mxu0 0.0
    %1746 = vmatprep.subr.mxu0 0.0
    %1747 = vmatpush1.msra.mxu0 0.0
    %1748 = vmatprep.subr.mxu0 0.0
    %1749 = vmatpush1.msra.mxu0 0.0
    %1750 = vmatprep.subr.mxu0 0.0
    %1751 = vmatpush1.msra.mxu0 0.0
    %1752 = vmatprep.subr.mxu0 0.0
    %1753 = vmatpush1.msra.mxu0 0.0
    %1754 = vmatprep.subr.mxu0 0.0
    %1755 = vmatpush1.msra.mxu0 0.0
    %1756 = vmatprep.subr.mxu0 0.0
    %1757 = vmatpush1.msra.mxu0 0.0
    %1758 = vmatprep.subr.mxu0 0.0
    %1759 = vmatpush1.msra.mxu0 0.0
    %1760 = vmatprep.subr.mxu0 0.0
    %1761 = vmatpush1.msra.mxu0 0.0
    %1762 = vmatprep.subr.mxu0 0.0
    %1763 = vmatpush1.msra.mxu0 0.0
    %1764 = vmatprep.subr.mxu0 0.0
    %1765 = vmatpush1.msra.mxu0 0.0
    %1766 = vmatprep.subr.mxu0 0.0
    %1767 = vmatpush1.msra.mxu0 0.0
    %1768 = vmatprep.subr.mxu0 0.0
    %1769 = vmatpush1.msra.mxu0 0.0
    %1770 = vmatprep.subr.mxu0 0.0
    %1771 = vmatpush1.msra.mxu0 0.0
    %1772 = vmatprep.subr.mxu0 0.0
    %1773 = vmatpush1.msra.mxu0 0.0
    %1774 = vmatprep.mubr.f32.mxu0 0.0
    %v1775 = vand.u32 %v1410, 4294901760
    %v1776 = vsub.f32 %v1410, %v1775
    %1777 = vmatmul.mubr.f32.gmra.mrb[0].mxu0 %v1776
    %v1778 = vpop.f32.mrb[0].mxu0
    %v1779 = vadd.f32 %v1665, %v1778
    %v1780 = vpop.f32.mrb[0].mxu0
    %v1781 = vadd.f32 %v1667, %v1780
    %1782 = vmatprep.mubr.f32.mxu0 0.0
    %v1783 = vand.u32 %v1413, 4294901760
    %v1784 = vsub.f32 %v1413, %v1783
    %1785 = vmatmul.mubr.f32.gmra.mrb[0].mxu0 %v1784
    %v1786 = vpop.f32.mrb[0].mxu0
    %v1787 = vadd.f32 %v1672, %v1786
    %v1788 = vpop.f32.mrb[0].mxu0
    %v1789 = vadd.f32 %v1674, %v1788
    %1790 = vmatprep.mubr.f32.mxu0 0.0
    %v1791 = vand.u32 %v1416, 4294901760
    %v1792 = vsub.f32 %v1416, %v1791
    %1793 = vmatmul.mubr.f32.gmra.mrb[0].mxu0 %v1792
    %v1794 = vpop.f32.mrb[0].mxu0
    %v1795 = vadd.f32 %v1679, %v1794
    %v1796 = vpop.f32.mrb[0].mxu0
    %v1797 = vadd.f32 %v1681, %v1796
    %1798 = vmatprep.mubr.f32.mxu0 0.0
    %v1799 = vand.u32 %v1419, 4294901760
    %v1800 = vsub.f32 %v1419, %v1799
    %1801 = vmatmul.mubr.f32.gmra.mrb[0].mxu0 %v1800
    %v1802 = vpop.f32.mrb[0].mxu0
    %v1803 = vadd.f32 %v1686, %v1802
    %v1804 = vpop.f32.mrb[0].mxu0
    %v1805 = vadd.f32 %v1688, %v1804
    %1806 = vdwg.mxu0
    %v1807 = vand.u32 %v1375, 4294901760
    %1808 = vmatprep.subr.mxu0 %v1807
    %v1809 = vand.u32 %v1374, 4294901760
    %1810 = vmatpush1.msra.mxu0 %v1809
    %v1811 = vand.u32 %v1377, 4294901760
    %1812 = vmatprep.subr.mxu0 %v1811
    %v1813 = vand.u32 %v1376, 4294901760
    %1814 = vmatpush1.msra.mxu0 %v1813
    %v1815 = vand.u32 %v1379, 4294901760
    %1816 = vmatprep.subr.mxu0 %v1815
    %v1817 = vand.u32 %v1378, 4294901760
    %1818 = vmatpush1.msra.mxu0 %v1817
    %v1819 = vand.u32 %v1381, 4294901760
    %1820 = vmatprep.subr.mxu0 %v1819
    %v1821 = vand.u32 %v1380, 4294901760
    %1822 = vmatpush1.msra.mxu0 %v1821
    %v1823 = vand.u32 %v1426, 4294901760
    %1824 = vmatprep.subr.mxu0 %v1823
    %v1825 = vand.u32 %v1423, 4294901760
    %1826 = vmatpush1.msra.mxu0 %v1825
    %1827 = vmatprep.subr.mxu0 0.0
    %1828 = vmatpush1.msra.mxu0 0.0
    %1829 = vmatprep.subr.mxu0 0.0
    %1830 = vmatpush1.msra.mxu0 0.0
    %1831 = vmatprep.subr.mxu0 0.0
    %1832 = vmatpush1.msra.mxu0 0.0
    %1833 = vmatprep.subr.mxu0 0.0
    %1834 = vmatpush1.msra.mxu0 0.0
    %1835 = vmatprep.subr.mxu0 0.0
    %1836 = vmatpush1.msra.mxu0 0.0
    %1837 = vmatprep.subr.mxu0 0.0
    %1838 = vmatpush1.msra.mxu0 0.0
    %1839 = vmatprep.subr.mxu0 0.0
    %1840 = vmatpush1.msra.mxu0 0.0
    %1841 = vmatprep.subr.mxu0 0.0
    %1842 = vmatpush1.msra.mxu0 0.0
    %1843 = vmatprep.subr.mxu0 0.0
    %1844 = vmatpush1.msra.mxu0 0.0
    %1845 = vmatprep.subr.mxu0 0.0
    %1846 = vmatpush1.msra.mxu0 0.0
    %1847 = vmatprep.subr.mxu0 0.0
    %1848 = vmatpush1.msra.mxu0 0.0
    %1849 = vmatprep.subr.mxu0 0.0
    %1850 = vmatpush1.msra.mxu0 0.0
    %1851 = vmatprep.subr.mxu0 0.0
    %1852 = vmatpush1.msra.mxu0 0.0
    %1853 = vmatprep.subr.mxu0 0.0
    %1854 = vmatpush1.msra.mxu0 0.0
    %1855 = vmatprep.subr.mxu0 0.0
    %1856 = vmatpush1.msra.mxu0 0.0
    %1857 = vmatprep.subr.mxu0 0.0
    %1858 = vmatpush1.msra.mxu0 0.0
    %1859 = vmatprep.subr.mxu0 0.0
    %1860 = vmatpush1.msra.mxu0 0.0
    %1861 = vmatprep.subr.mxu0 0.0
    %1862 = vmatpush1.msra.mxu0 0.0
    %1863 = vmatprep.subr.mxu0 0.0
    %1864 = vmatpush1.msra.mxu0 0.0
    %1865 = vmatprep.subr.mxu0 0.0
    %1866 = vmatpush1.msra.mxu0 0.0
    %1867 = vmatprep.subr.mxu0 0.0
    %1868 = vmatpush1.msra.mxu0 0.0
    %1869 = vmatprep.subr.mxu0 0.0
    %1870 = vmatpush1.msra.mxu0 0.0
    %1871 = vmatprep.subr.mxu0 0.0
    %1872 = vmatpush1.msra.mxu0 0.0
    %1873 = vmatprep.subr.mxu0 0.0
    %1874 = vmatpush1.msra.mxu0 0.0
    %1875 = vmatprep.subr.mxu0 0.0
    %1876 = vmatpush1.msra.mxu0 0.0
    %1877 = vmatprep.subr.mxu0 0.0
    %1878 = vmatpush1.msra.mxu0 0.0
    %1879 = vmatprep.subr.mxu0 0.0
    %1880 = vmatpush1.msra.mxu0 0.0
    %1881 = vmatprep.mubr.f32.mxu0 0.0
    %v1882 = vand.u32 %v1410, 4294901760
    %v1883 = vsub.f32 %v1410, %v1882
    %v1884 = vand.u32 %v1883, 4294901760
    %1885 = vmatmul.mubr.f32.gmra.mrb[0].mxu0 %v1884
    %v1886 = vpop.f32.mrb[0].mxu0
    %v1887 = vadd.f32 %v1779, %v1886
    %v1888 = vpop.f32.mrb[0].mxu0
    %v1889 = vadd.f32 %v1781, %v1888
    %1890 = vmatprep.mubr.f32.mxu0 0.0
    %v1891 = vand.u32 %v1413, 4294901760
    %v1892 = vsub.f32 %v1413, %v1891
    %v1893 = vand.u32 %v1892, 4294901760
    %1894 = vmatmul.mubr.f32.gmra.mrb[0].mxu0 %v1893
    %v1895 = vpop.f32.mrb[0].mxu0
    %v1896 = vadd.f32 %v1787, %v1895
    %v1897 = vpop.f32.mrb[0].mxu0
    %v1898 = vadd.f32 %v1789, %v1897
    %1899 = vmatprep.mubr.f32.mxu0 0.0
    %v1900 = vand.u32 %v1416, 4294901760
    %v1901 = vsub.f32 %v1416, %v1900
    %v1902 = vand.u32 %v1901, 4294901760
    %1903 = vmatmul.mubr.f32.gmra.mrb[0].mxu0 %v1902
    %v1904 = vpop.f32.mrb[0].mxu0
    %v1905 = vadd.f32 %v1795, %v1904
    %v1906 = vpop.f32.mrb[0].mxu0
    %v1907 = vadd.f32 %v1797, %v1906
    %1908 = vmatprep.mubr.f32.mxu0 0.0
    %v1909 = vand.u32 %v1419, 4294901760
    %v1910 = vsub.f32 %v1419, %v1909
    %v1911 = vand.u32 %v1910, 4294901760
    %1912 = vmatmul.mubr.f32.gmra.mrb[0].mxu0 %v1911
    %v1913 = vpop.f32.mrb[0].mxu0
    %v1914 = vadd.f32 %v1803, %v1913
    %v1915 = vpop.f32.mrb[0].mxu0
    %v1916 = vadd.f32 %v1805, %v1915
    %1917 = vdwg.mxu0
    %v1918 = vand.u32 %v1375, 4294901760
    %v1919 = vsub.f32 %v1375, %v1918
    %v1920 = vand.u32 %v1919, 4294901760
    %1921 = vmatprep.subr.mxu0 %v1920
    %v1922 = vand.u32 %v1374, 4294901760
    %v1923 = vsub.f32 %v1374, %v1922
    %v1924 = vand.u32 %v1923, 4294901760
    %1925 = vmatpush1.msra.mxu0 %v1924
    %v1926 = vand.u32 %v1377, 4294901760
    %v1927 = vsub.f32 %v1377, %v1926
    %v1928 = vand.u32 %v1927, 4294901760
    %1929 = vmatprep.subr.mxu0 %v1928
    %v1930 = vand.u32 %v1376, 4294901760
    %v1931 = vsub.f32 %v1376, %v1930
    %v1932 = vand.u32 %v1931, 4294901760
    %1933 = vmatpush1.msra.mxu0 %v1932
    %v1934 = vand.u32 %v1379, 4294901760
    %v1935 = vsub.f32 %v1379, %v1934
    %v1936 = vand.u32 %v1935, 4294901760
    %1937 = vmatprep.subr.mxu0 %v1936
    %v1938 = vand.u32 %v1378, 4294901760
    %v1939 = vsub.f32 %v1378, %v1938
    %v1940 = vand.u32 %v1939, 4294901760
    %1941 = vmatpush1.msra.mxu0 %v1940
    %v1942 = vand.u32 %v1381, 4294901760
    %v1943 = vsub.f32 %v1381, %v1942
    %v1944 = vand.u32 %v1943, 4294901760
    %1945 = vmatprep.subr.mxu0 %v1944
    %v1946 = vand.u32 %v1380, 4294901760
    %v1947 = vsub.f32 %v1380, %v1946
    %v1948 = vand.u32 %v1947, 4294901760
    %1949 = vmatpush1.msra.mxu0 %v1948
    %v1950 = vand.u32 %v1426, 4294901760
    %v1951 = vsub.f32 %v1426, %v1950
    %v1952 = vand.u32 %v1951, 4294901760
    %1953 = vmatprep.subr.mxu0 %v1952
    %v1954 = vand.u32 %v1423, 4294901760
    %v1955 = vsub.f32 %v1423, %v1954
    %v1956 = vand.u32 %v1955, 4294901760
    %1957 = vmatpush1.msra.mxu0 %v1956
    %1958 = vmatprep.subr.mxu0 0.0
    %1959 = vmatpush1.msra.mxu0 0.0
    %1960 = vmatprep.subr.mxu0 0.0
    %1961 = vmatpush1.msra.mxu0 0.0
    %1962 = vmatprep.subr.mxu0 0.0
    %1963 = vmatpush1.msra.mxu0 0.0
    %1964 = vmatprep.subr.mxu0 0.0
    %1965 = vmatpush1.msra.mxu0 0.0
    %1966 = vmatprep.subr.mxu0 0.0
    %1967 = vmatpush1.msra.mxu0 0.0
    %1968 = vmatprep.subr.mxu0 0.0
    %1969 = vmatpush1.msra.mxu0 0.0
    %1970 = vmatprep.subr.mxu0 0.0
    %1971 = vmatpush1.msra.mxu0 0.0
    %1972 = vmatprep.subr.mxu0 0.0
    %1973 = vmatpush1.msra.mxu0 0.0
    %1974 = vmatprep.subr.mxu0 0.0
    %1975 = vmatpush1.msra.mxu0 0.0
    %1976 = vmatprep.subr.mxu0 0.0
    %1977 = vmatpush1.msra.mxu0 0.0
    %1978 = vmatprep.subr.mxu0 0.0
    %1979 = vmatpush1.msra.mxu0 0.0
    %1980 = vmatprep.subr.mxu0 0.0
    %1981 = vmatpush1.msra.mxu0 0.0
    %1982 = vmatprep.subr.mxu0 0.0
    %1983 = vmatpush1.msra.mxu0 0.0
    %1984 = vmatprep.subr.mxu0 0.0
    %1985 = vmatpush1.msra.mxu0 0.0
    %1986 = vmatprep.subr.mxu0 0.0
    %1987 = vmatpush1.msra.mxu0 0.0
    %1988 = vmatprep.subr.mxu0 0.0
    %1989 = vmatpush1.msra.mxu0 0.0
    %1990 = vmatprep.subr.mxu0 0.0
    %1991 = vmatpush1.msra.mxu0 0.0
    %1992 = vmatprep.subr.mxu0 0.0
    %1993 = vmatpush1.msra.mxu0 0.0
    %1994 = vmatprep.subr.mxu0 0.0
    %1995 = vmatpush1.msra.mxu0 0.0
    %1996 = vmatprep.subr.mxu0 0.0
    %1997 = vmatpush1.msra.mxu0 0.0
    %1998 = vmatprep.subr.mxu0 0.0
    %1999 = vmatpush1.msra.mxu0 0.0
    %2000 = vmatprep.subr.mxu0 0.0
    %2001 = vmatpush1.msra.mxu0 0.0
    %2002 = vmatprep.subr.mxu0 0.0
    %2003 = vmatpush1.msra.mxu0 0.0
    %2004 = vmatprep.subr.mxu0 0.0
    %2005 = vmatpush1.msra.mxu0 0.0
    %2006 = vmatprep.subr.mxu0 0.0
    %2007 = vmatpush1.msra.mxu0 0.0
    %2008 = vmatprep.subr.mxu0 0.0
    %2009 = vmatpush1.msra.mxu0 0.0
    %2010 = vmatprep.subr.mxu0 0.0
    %2011 = vmatpush1.msra.mxu0 0.0
    %2012 = vmatprep.mubr.f32.mxu0 0.0
    %v2013 = vand.u32 %v1410, 4294901760
    %2014 = vmatmul.mubr.f32.gmra.mrb[0].mxu0 %v2013
    %v2015 = vpop.f32.mrb[0].mxu0
    %v2016 = vadd.f32 %v1887, %v2015
    %v2017 = vpop.f32.mrb[0].mxu0
    %v2018 = vadd.f32 %v1889, %v2017
    %2019 = vmatprep.mubr.f32.mxu0 0.0
    %v2020 = vand.u32 %v1413, 4294901760
    %2021 = vmatmul.mubr.f32.gmra.mrb[0].mxu0 %v2020
    %v2022 = vpop.f32.mrb[0].mxu0
    %v2023 = vadd.f32 %v1896, %v2022
    %v2024 = vpop.f32.mrb[0].mxu0
    %v2025 = vadd.f32 %v1898, %v2024
    %2026 = vmatprep.mubr.f32.mxu0 0.0
    %v2027 = vand.u32 %v1416, 4294901760
    %2028 = vmatmul.mubr.f32.gmra.mrb[0].mxu0 %v2027
    %v2029 = vpop.f32.mrb[0].mxu0
    %v2030 = vadd.f32 %v1905, %v2029
    %v2031 = vpop.f32.mrb[0].mxu0
    %v2032 = vadd.f32 %v1907, %v2031
    %2033 = vmatprep.mubr.f32.mxu0 0.0
    %v2034 = vand.u32 %v1419, 4294901760
    %2035 = vmatmul.mubr.f32.gmra.mrb[0].mxu0 %v2034
    %v2036 = vpop.f32.mrb[0].mxu0
    %v2037 = vadd.f32 %v1914, %v2036
    %v2038 = vpop.f32.mrb[0].mxu0
    %v2039 = vadd.f32 %v1916, %v2038
    %2040 = vdwg.mxu0
    %v2041 = vand.u32 %v1375, 4294901760
    %2042 = vmatprep.subr.mxu0 %v2041
    %v2043 = vand.u32 %v1374, 4294901760
    %2044 = vmatpush1.msra.mxu0 %v2043
    %v2045 = vand.u32 %v1377, 4294901760
    %2046 = vmatprep.subr.mxu0 %v2045
    %v2047 = vand.u32 %v1376, 4294901760
    %2048 = vmatpush1.msra.mxu0 %v2047
    %v2049 = vand.u32 %v1379, 4294901760
    %2050 = vmatprep.subr.mxu0 %v2049
    %v2051 = vand.u32 %v1378, 4294901760
    %2052 = vmatpush1.msra.mxu0 %v2051
    %v2053 = vand.u32 %v1381, 4294901760
    %2054 = vmatprep.subr.mxu0 %v2053
    %v2055 = vand.u32 %v1380, 4294901760
    %2056 = vmatpush1.msra.mxu0 %v2055
    %v2057 = vand.u32 %v1426, 4294901760
    %2058 = vmatprep.subr.mxu0 %v2057
    %v2059 = vand.u32 %v1423, 4294901760
    %2060 = vmatpush1.msra.mxu0 %v2059
    %2061 = vmatprep.subr.mxu0 0.0
    %2062 = vmatpush1.msra.mxu0 0.0
    %2063 = vmatprep.subr.mxu0 0.0
    %2064 = vmatpush1.msra.mxu0 0.0
    %2065 = vmatprep.subr.mxu0 0.0
    %2066 = vmatpush1.msra.mxu0 0.0
    %2067 = vmatprep.subr.mxu0 0.0
    %2068 = vmatpush1.msra.mxu0 0.0
    %2069 = vmatprep.subr.mxu0 0.0
    %2070 = vmatpush1.msra.mxu0 0.0
    %2071 = vmatprep.subr.mxu0 0.0
    %2072 = vmatpush1.msra.mxu0 0.0
    %2073 = vmatprep.subr.mxu0 0.0
    %2074 = vmatpush1.msra.mxu0 0.0
    %2075 = vmatprep.subr.mxu0 0.0
    %2076 = vmatpush1.msra.mxu0 0.0
    %2077 = vmatprep.subr.mxu0 0.0
    %2078 = vmatpush1.msra.mxu0 0.0
    %2079 = vmatprep.subr.mxu0 0.0
    %2080 = vmatpush1.msra.mxu0 0.0
    %2081 = vmatprep.subr.mxu0 0.0
    %2082 = vmatpush1.msra.mxu0 0.0
    %2083 = vmatprep.subr.mxu0 0.0
    %2084 = vmatpush1.msra.mxu0 0.0
    %2085 = vmatprep.subr.mxu0 0.0
    %2086 = vmatpush1.msra.mxu0 0.0
    %2087 = vmatprep.subr.mxu0 0.0
    %2088 = vmatpush1.msra.mxu0 0.0
    %2089 = vmatprep.subr.mxu0 0.0
    %2090 = vmatpush1.msra.mxu0 0.0
    %2091 = vmatprep.subr.mxu0 0.0
    %2092 = vmatpush1.msra.mxu0 0.0
    %2093 = vmatprep.subr.mxu0 0.0
    %2094 = vmatpush1.msra.mxu0 0.0
    %2095 = vmatprep.subr.mxu0 0.0
    %2096 = vmatpush1.msra.mxu0 0.0
    %2097 = vmatprep.subr.mxu0 0.0
    %2098 = vmatpush1.msra.mxu0 0.0
    %2099 = vmatprep.subr.mxu0 0.0
    %2100 = vmatpush1.msra.mxu0 0.0
    %2101 = vmatprep.subr.mxu0 0.0
    %2102 = vmatpush1.msra.mxu0 0.0
    %2103 = vmatprep.subr.mxu0 0.0
    %2104 = vmatpush1.msra.mxu0 0.0
    %2105 = vmatprep.subr.mxu0 0.0
    %2106 = vmatpush1.msra.mxu0 0.0
    %2107 = vmatprep.subr.mxu0 0.0
    %2108 = vmatpush1.msra.mxu0 0.0
    %2109 = vmatprep.subr.mxu0 0.0
    %2110 = vmatpush1.msra.mxu0 0.0
    %2111 = vmatprep.subr.mxu0 0.0
    %2112 = vmatpush1.msra.mxu0 0.0
    %2113 = vmatprep.subr.mxu0 0.0
    %2114 = vmatpush1.msra.mxu0 0.0
    %2115 = vmatprep.mubr.f32.mxu0 0.0
    %v2116 = vand.u32 %v1410, 4294901760
    %2117 = vmatmul.mubr.f32.gmra.mrb[0].mxu0 %v2116
    %v2118 = vpop.f32.mrb[0].mxu0
    %v2119 = vadd.f32 %v2016, %v2118
    %v2120 = vpop.f32.mrb[0].mxu0
    %v2121 = vadd.f32 %v2018, %v2120
    %2122 = vmatprep.mubr.f32.mxu0 0.0
    %v2123 = vand.u32 %v1413, 4294901760
    %2124 = vmatmul.mubr.f32.gmra.mrb[0].mxu0 %v2123
    %v2125 = vpop.f32.mrb[0].mxu0
    %v2126 = vadd.f32 %v2023, %v2125
    %v2127 = vpop.f32.mrb[0].mxu0
    %v2128 = vadd.f32 %v2025, %v2127
    %2129 = vmatprep.mubr.f32.mxu0 0.0
    %v2130 = vand.u32 %v1416, 4294901760
    %2131 = vmatmul.mubr.f32.gmra.mrb[0].mxu0 %v2130
    %v2132 = vpop.f32.mrb[0].mxu0
    %v2133 = vadd.f32 %v2030, %v2132
    %v2134 = vpop.f32.mrb[0].mxu0
    %v2135 = vadd.f32 %v2032, %v2134
    %2136 = vmatprep.mubr.f32.mxu0 0.0
    %v2137 = vand.u32 %v1419, 4294901760
    %2138 = vmatmul.mubr.f32.gmra.mrb[0].mxu0 %v2137
    %v2139 = vpop.f32.mrb[0].mxu0
    %v2140 = vadd.f32 %v2037, %v2139
    %v2141 = vpop.f32.mrb[0].mxu0
    %v2142 = vadd.f32 %v2039, %v2141
    %2143 = vdwg.mxu0
    %2144 = vst [vmem:[#allocation6] sm:$0xff] %v2119
    %2145 = vst [vmem:[#allocation6 + $0x8] sm:$0xff] %v2121
    %2146 = vst [vmem:[#allocation6 + $0x10] sm:$0xff] %v2126
    %2147 = vst [vmem:[#allocation6 + $0x18] sm:$0xff] %v2128
    %2148 = vst [vmem:[#allocation6 + $0x20] sm:$0xff] %v2133
    %2149 = vst [vmem:[#allocation6 + $0x28] sm:$0xff] %v2135
    %2150 = vst [vmem:[#allocation6 + $0x30] sm:$0xff] %v2140
    %2151 = vst [vmem:[#allocation6 + $0x38] sm:$0xff] %v2142
    // Predicated region
    $region22: #{tpu_custom_call.1} parent=1 // pred_check
      _
    $region23: #{tpu_custom_call.1} parent=1 // pred_check_branch
      %2153 = sbr.rel (0) target = $region25
    $region24: #{tpu_custom_call.1} parent=1 // pred_region
      %s2155 = ssub.s32 1024, 1024
      %2156 = vsyncadd [#allocation5], %s2155
      %s2157 = sshll.u32 [#allocation6], 4
      %s2158 = int_to_ptr.vmem [resolvable:$true] %s2157
      %2163 = dma.vmem_to_hbm [thread:$0]  %s2158, 1024, %s4, [#allocation5], 256, 256, 16
    $region25: #{tpu_custom_call.1} parent=1 // pred_fallthru
      _
    // Predicated region
    $region26: #{tpu_custom_call.1} parent=1 // pred_check
      _
    $region27: #{tpu_custom_call.1} parent=1 // pred_check_branch
      %2165 = sbr.rel (0) target = $region29
    $region28: #{tpu_custom_call.1} parent=1 // pred_region
      %2166 = dma.done [#allocation5], 1024
    $region29: #{tpu_custom_call.1} parent=1 // pred_fallthru
      _
    %2167 = vsyncpa [#allocation4], 1
    %2168 = vsyncpa [#allocation5], 1

</llo_original>
